<compile_context>
chip_gen: v6e
topology: v6e:2x2x1
jax: 0.10.0
libtpu: 0.0.40
codegen_flags: <defaults>
</compile_context>

<pallas_src>
import functools

import jax
import jax.numpy as jnp
import numpy as np
from jax.experimental import pallas as pl
from jax.experimental.pallas import tpu as pltpu


# ---------------------------------------------------------------------------
# Fused kernel: linear -> res blocks -> 1x1 conv -> softmax, all in VMEM.
# Activation slab layout (channels-last, position-major, batch padded to BP=8):
#   x_scr[(l + pad) * BP + b, c]  <->  torch activation[b, c, l]
# ---------------------------------------------------------------------------
def _generator_kernel(z_ref, lin_w_ref, lin_b_ref, res_w_ref, res_b_ref,
                      fin_w_ref, fin_b_ref, out_ref, x_scr, *,
                      batch_pad, seq_len, gen_dim, res_layers, filter_width):
    BP, L, C, K = batch_pad, seq_len, gen_dim, filter_width
    pad = (K - 1) // 2

    # Zero only the sequence-padding row blocks; they are never written again, so
    # zero padding persists for every residual layer (ReLU(0) = 0).
    x_scr[0:pad * BP, :] = jnp.zeros((pad * BP, C), jnp.float32)
    x_scr[(pad + L) * BP:(2 * pad + L) * BP, :] = jnp.zeros((pad * BP, C),
                                                            jnp.float32)

    # ---- Linear(latent -> gen_dim*seq_len): ONE matmul for all positions.
    # lin_w columns are grouped (l, c) so y[b, l*C + c] = torch_linear[b, c*L + l].
    y = (jnp.dot(z_ref[...], lin_w_ref[...], preferred_element_type=jnp.float32)
         + lin_b_ref[...])                                        # [BP, L*C]
    for l in range(L):                                            # static unroll
        # lane-extract + full-8-sublane aligned store
        x_scr[(pad + l) * BP:(pad + l + 1) * BP, :] = y[:, l * C:(l + 1) * C]

    # ---- res_layers x ResidualBlock: x + 0.3 * Conv1d(ReLU(x), k=K, same pad)
    # Each block is a single im2col matmul: [L*BP, K*C] @ [K*C, C].
    for layer in range(res_layers):                               # static unroll
        xp = x_scr[...]                                           # [(L+2p)*BP, C]
        rx = jnp.maximum(xp, 0.0)                                 # ReLU (pads stay 0)
        im2col = jnp.concatenate(
            [rx[k * BP:(k + L) * BP, :] for k in range(K)], axis=1)  # [L*BP, K*C]
        conv = (jnp.dot(im2col, res_w_ref[layer],
                        preferred_element_type=jnp.float32)
                + res_b_ref[layer])                               # [L*BP, C]
        x = xp[pad * BP:(pad + L) * BP, :]                        # un-padded input
        x_scr[pad * BP:(pad + L) * BP, :] = x + 0.3 * conv

    # ---- final 1x1 conv (gen_dim -> vocab) + stable softmax over vocab
    x = x_scr[pad * BP:(pad + L) * BP, :]                         # [L*BP, C]
    logits = (jnp.dot(x, fin_w_ref[...], preferred_element_type=jnp.float32)
              + fin_b_ref[...])                                   # [L*BP, V]
    m = jnp.max(logits, axis=-1, keepdims=True)
    e = jnp.exp(logits - m)
    s = jnp.sum(e, axis=-1, keepdims=True)
    out_ref[...] = e * pl.reciprocal(s, approx=False)


def generator_forward(params, z):
    """Fused Pallas forward. Returns probabilities in torch NCL layout [B, V, L]."""
    B, _ = z.shape
    C, V = params["fin_w"].shape
    L = params["lin_w"].shape[1] // C
    res_layers = params["res_w"].shape[0]
    K = params["res_w"].shape[1] // C
    pad = (K - 1) // 2
    BP = ((B + 7) // 8) * 8                     # sublane-aligned batch (>= 8)

    z_pad = jnp.pad(z, ((0, BP - B), (0, 0)))   # tiny; keeps all slab rows 8-aligned

    kern = functools.partial(_generator_kernel, batch_pad=BP, seq_len=L,
                             gen_dim=C, res_layers=res_layers, filter_width=K)
    out_flat = pl.pallas_call(
        kern,
        out_shape=jax.ShapeDtypeStruct((L * BP, V), jnp.float32),
        in_specs=[pl.BlockSpec(memory_space=pltpu.MemorySpace.VMEM)] * 7,
        out_specs=pl.BlockSpec(memory_space=pltpu.MemorySpace.VMEM),
        scratch_shapes=[pltpu.VMEM(((L + 2 * pad) * BP, C), jnp.float32)],
    )(z_pad, params["lin_w"], params["lin_b"], params["res_w"],
      params["res_b"], params["fin_w"], params["fin_b"])

    # Rows are (position, padded-batch); drop padded-batch rows and go back to
    # torch NCL.  Tiny (L*B*V elements) reshape+transpose left to XLA glue.
    return jnp.transpose(out_flat.reshape(L, BP, V)[:, :B, :], (1, 2, 0))


# ---------------------------------------------------------------------------
# Parameter construction: torch-layout weights (for the reference) plus a
# one-time conversion into kernel-friendly layouts (zero per-call cost).
# ---------------------------------------------------------------------------
def init_params(key, latent_dim, gen_dim, seq_len, res_layers, vocab_size,
                filter_width=5):
    C, L, K, V = gen_dim, seq_len, filter_width, vocab_size
    keys = jax.random.split(key, 4 + 2 * res_layers)
    scale = 0.1

    # torch layouts
    lin_w_t = scale * jax.random.normal(keys[0], (C * L, latent_dim), jnp.float32)
    lin_b_t = scale * jax.random.normal(keys[1], (C * L,), jnp.float32)
    res_w_t, res_b_t = [], []
    for i in range(res_layers):
        res_w_t.append(scale * jax.random.normal(keys[2 + 2 * i], (C, C, K),
                                                 jnp.float32))      # [Cout, Cin, K]
        res_b_t.append(scale * jax.random.normal(keys[3 + 2 * i], (C,), jnp.float32))
    res_w_t = jnp.stack(res_w_t)                                    # [layers, C, C, K]
    res_b_t = jnp.stack(res_b_t)                                    # [layers, C]
    fin_w_t = scale * jax.random.normal(keys[2 + 2 * res_layers], (V, C, 1),
                                        jnp.float32)
    fin_b_t = scale * jax.random.normal(keys[3 + 2 * res_layers], (V,), jnp.float32)

    torch_params = {"lin_w": lin_w_t, "lin_b": lin_b_t, "res_w": res_w_t,
                    "res_b": res_b_t, "fin_w": fin_w_t, "fin_b": fin_b_t}

    # kernel layouts (one-time host-side permutations)
    #   lin_w_k[k, l*C + c] = lin_w_t[c*L + l, k]
    lin_w_k = jnp.transpose(lin_w_t.reshape(C, L, latent_dim),
                            (2, 1, 0)).reshape(latent_dim, L * C)
    lin_b_k = jnp.transpose(lin_b_t.reshape(C, L), (1, 0)).reshape(1, L * C)
    #   res_w_k[layer, k*C + ci, co] = res_w_t[layer, co, ci, k]   (im2col layout)
    res_w_k = jnp.transpose(res_w_t, (0, 3, 2, 1)).reshape(res_layers, K * C, C)
    res_b_k = res_b_t.reshape(res_layers, 1, C)
    fin_w_k = jnp.transpose(fin_w_t[:, :, 0], (1, 0))               # [C, V]
    fin_b_k = fin_b_t.reshape(1, V)

    kernel_params = {"lin_w": lin_w_k, "lin_b": lin_b_k, "res_w": res_w_k,
                     "res_b": res_b_k, "fin_w": fin_w_k, "fin_b": fin_b_k}
    return kernel_params, torch_params


# ---------------------------------------------------------------------------
# Pure-JAX reference operating on the torch-layout weights (mirrors the module)
# ---------------------------------------------------------------------------
def reference_forward(tp, z, gen_dim, seq_len):
    C, L = gen_dim, seq_len
    res_layers = tp["res_w"].shape[0]
    K = tp["res_w"].shape[-1]
    pad = (K - 1) // 2
    B = z.shape[0]

    out = z @ tp["lin_w"].T + tp["lin_b"]                 # [B, C*L]
    x = out.reshape(B, C, L)                              # NCL
    for layer in range(res_layers):
        rx = jnp.maximum(x, 0.0)
        rxp = jnp.pad(rx, ((0, 0), (0, 0), (pad, pad)))
        conv = jnp.zeros_like(x) + tp["res_b"][layer][None, :, None]
        for k in range(K):
            conv = conv + jnp.einsum("oi,bil->bol", tp["res_w"][layer][:, :, k],
                                     rxp[:, :, k:k + L])
        x = x + 0.3 * conv
    logits = jnp.einsum("oi,bil->bol", tp["fin_w"][:, :, 0], x) \
        + tp["fin_b"][None, :, None]
    return jax.nn.softmax(logits, axis=1)                 # [B, V, L]


if __name__ == "__main__":
    # Small, deterministic config consistent with the module's forward.
    B, latent_dim, gen_dim, seq_len, res_layers, vocab_size = 2, 32, 32, 16, 2, 8

    root = jax.random.PRNGKey(0)
    k_params, k_z = jax.random.split(root)
    kparams, tparams = init_params(k_params, latent_dim, gen_dim, seq_len,
                                   res_layers, vocab_size)
    z = jax.random.normal(k_z, (B, latent_dim), jnp.float32)

    fwd = jax.jit(generator_forward)
    out = jax.block_until_ready(fwd(kparams, z))
    assert out.shape == (B, vocab_size, seq_len)

    ref = jax.block_until_ready(reference_forward(tparams, z, gen_dim, seq_len))
    np.testing.assert_allclose(np.asarray(out), np.asarray(ref),
                               rtol=1e-5, atol=1e-5)
    # softmax over the channel (vocab) dim sums to 1
    np.testing.assert_allclose(np.asarray(out).sum(axis=1),
                               np.ones((B, seq_len)), rtol=1e-5, atol=1e-5)

    print("KERNEL_OK")
</pallas_src>

<mosaic_0001>
module attributes {stable_mosaic.version = 11 : i64} {
  func.func @_generator_kernel(%arg0: memref<8x32xf32, #tpu.memory_space<vmem>>, %arg1: memref<32x512xf32, #tpu.memory_space<vmem>>, %arg2: memref<1x512xf32, #tpu.memory_space<vmem>>, %arg3: memref<2x160x32xf32, #tpu.memory_space<vmem>>, %arg4: memref<2x1x32xf32, #tpu.memory_space<vmem>>, %arg5: memref<32x8xf32, #tpu.memory_space<vmem>>, %arg6: memref<1x8xf32, #tpu.memory_space<vmem>>, %arg7: memref<128x8xf32, #tpu.memory_space<vmem>>, %arg8: memref<160x32xf32, #tpu.memory_space<vmem>>) attributes {dimension_semantics = [], scalar_prefetch = 0 : i64, scratch_operands = 1 : i64, tpu.core_type = #tpu.core_type<tc>} {
    %cst = arith.constant 0.000000e+00 : f32
    %0 = vector.broadcast %cst : f32 to vector<16x32xf32>
    %c0 = arith.constant 0 : index
    %c0_0 = arith.constant 0 : index
    %1 = vector.load %arg8[%c0, %c0_0] : memref<160x32xf32, #tpu.memory_space<vmem>>, vector<16x32xf32>
    tpu.vector_store %arg8[%c0, %c0_0], %0 {strides = array<i32>} : memref<160x32xf32, #tpu.memory_space<vmem>>, vector<16x32xf32>,
    %cst_1 = arith.constant 0.000000e+00 : f32
    %2 = vector.broadcast %cst_1 : f32 to vector<16x32xf32>
    %c144 = arith.constant 144 : index
    %c0_2 = arith.constant 0 : index
    %3 = vector.load %arg8[%c144, %c0_2] : memref<160x32xf32, #tpu.memory_space<vmem>>, vector<16x32xf32>
    tpu.vector_store %arg8[%c144, %c0_2], %2 {strides = array<i32>} : memref<160x32xf32, #tpu.memory_space<vmem>>, vector<16x32xf32>,
    %c0_3 = arith.constant 0 : index
    %c0_4 = arith.constant 0 : index
    %4 = vector.load %arg0[%c0_3, %c0_4] : memref<8x32xf32, #tpu.memory_space<vmem>>, vector<8x32xf32>
    %c0_5 = arith.constant 0 : index
    %c0_6 = arith.constant 0 : index
    %5 = vector.load %arg1[%c0_5, %c0_6] : memref<32x512xf32, #tpu.memory_space<vmem>>, vector<32x512xf32>
    %cst_7 = arith.constant dense<0.000000e+00> : vector<8x512xf32>
    %6 = tpu.matmul %4, %5, %cst_7 {dimension_numbers = #tpu.dot_dimension_numbers<[1], [0], [0], [1], [0, 0, 1, 1], [], []>} : vector<8x32xf32>, vector<32x512xf32>, vector<8x512xf32> -> vector<8x512xf32>
    %c0_8 = arith.constant 0 : index
    %c0_9 = arith.constant 0 : index
    %7 = vector.load %arg2[%c0_8, %c0_9] : memref<1x512xf32, #tpu.memory_space<vmem>>, vector<1x512xf32>
    %8 = vector.broadcast %7 : vector<1x512xf32> to vector<8x512xf32>
    %9 = arith.addf %6, %8 : vector<8x512xf32>
    %10 = vector.extract_strided_slice %9 {offsets = [0, 0], sizes = [8, 32], strides = [1, 1]} : vector<8x512xf32> to vector<8x32xf32>
    %c16 = arith.constant 16 : index
    %c0_10 = arith.constant 0 : index
    %11 = vector.load %arg8[%c16, %c0_10] : memref<160x32xf32, #tpu.memory_space<vmem>>, vector<8x32xf32>
    tpu.vector_store %arg8[%c16, %c0_10], %10 {strides = array<i32>} : memref<160x32xf32, #tpu.memory_space<vmem>>, vector<8x32xf32>,
    %12 = vector.extract_strided_slice %9 {offsets = [0, 32], sizes = [8, 32], strides = [1, 1]} : vector<8x512xf32> to vector<8x32xf32>
    %c24 = arith.constant 24 : index
    %c0_11 = arith.constant 0 : index
    %13 = vector.load %arg8[%c24, %c0_11] : memref<160x32xf32, #tpu.memory_space<vmem>>, vector<8x32xf32>
    tpu.vector_store %arg8[%c24, %c0_11], %12 {strides = array<i32>} : memref<160x32xf32, #tpu.memory_space<vmem>>, vector<8x32xf32>,
    %14 = vector.extract_strided_slice %9 {offsets = [0, 64], sizes = [8, 32], strides = [1, 1]} : vector<8x512xf32> to vector<8x32xf32>
    %c32 = arith.constant 32 : index
    %c0_12 = arith.constant 0 : index
    %15 = vector.load %arg8[%c32, %c0_12] : memref<160x32xf32, #tpu.memory_space<vmem>>, vector<8x32xf32>
    tpu.vector_store %arg8[%c32, %c0_12], %14 {strides = array<i32>} : memref<160x32xf32, #tpu.memory_space<vmem>>, vector<8x32xf32>,
    %16 = vector.extract_strided_slice %9 {offsets = [0, 96], sizes = [8, 32], strides = [1, 1]} : vector<8x512xf32> to vector<8x32xf32>
    %c40 = arith.constant 40 : index
    %c0_13 = arith.constant 0 : index
    %17 = vector.load %arg8[%c40, %c0_13] : memref<160x32xf32, #tpu.memory_space<vmem>>, vector<8x32xf32>
    tpu.vector_store %arg8[%c40, %c0_13], %16 {strides = array<i32>} : memref<160x32xf32, #tpu.memory_space<vmem>>, vector<8x32xf32>,
    %18 = vector.extract_strided_slice %9 {offsets = [0, 128], sizes = [8, 32], strides = [1, 1]} : vector<8x512xf32> to vector<8x32xf32>
    %c48 = arith.constant 48 : index
    %c0_14 = arith.constant 0 : index
    %19 = vector.load %arg8[%c48, %c0_14] : memref<160x32xf32, #tpu.memory_space<vmem>>, vector<8x32xf32>
    tpu.vector_store %arg8[%c48, %c0_14], %18 {strides = array<i32>} : memref<160x32xf32, #tpu.memory_space<vmem>>, vector<8x32xf32>,
    %20 = vector.extract_strided_slice %9 {offsets = [0, 160], sizes = [8, 32], strides = [1, 1]} : vector<8x512xf32> to vector<8x32xf32>
    %c56 = arith.constant 56 : index
    %c0_15 = arith.constant 0 : index
    %21 = vector.load %arg8[%c56, %c0_15] : memref<160x32xf32, #tpu.memory_space<vmem>>, vector<8x32xf32>
    tpu.vector_store %arg8[%c56, %c0_15], %20 {strides = array<i32>} : memref<160x32xf32, #tpu.memory_space<vmem>>, vector<8x32xf32>,
    %22 = vector.extract_strided_slice %9 {offsets = [0, 192], sizes = [8, 32], strides = [1, 1]} : vector<8x512xf32> to vector<8x32xf32>
    %c64 = arith.constant 64 : index
    %c0_16 = arith.constant 0 : index
    %23 = vector.load %arg8[%c64, %c0_16] : memref<160x32xf32, #tpu.memory_space<vmem>>, vector<8x32xf32>
    tpu.vector_store %arg8[%c64, %c0_16], %22 {strides = array<i32>} : memref<160x32xf32, #tpu.memory_space<vmem>>, vector<8x32xf32>,
    %24 = vector.extract_strided_slice %9 {offsets = [0, 224], sizes = [8, 32], strides = [1, 1]} : vector<8x512xf32> to vector<8x32xf32>
    %c72 = arith.constant 72 : index
    %c0_17 = arith.constant 0 : index
    %25 = vector.load %arg8[%c72, %c0_17] : memref<160x32xf32, #tpu.memory_space<vmem>>, vector<8x32xf32>
    tpu.vector_store %arg8[%c72, %c0_17], %24 {strides = array<i32>} : memref<160x32xf32, #tpu.memory_space<vmem>>, vector<8x32xf32>,
    %26 = vector.extract_strided_slice %9 {offsets = [0, 256], sizes = [8, 32], strides = [1, 1]} : vector<8x512xf32> to vector<8x32xf32>
    %c80 = arith.constant 80 : index
    %c0_18 = arith.constant 0 : index
    %27 = vector.load %arg8[%c80, %c0_18] : memref<160x32xf32, #tpu.memory_space<vmem>>, vector<8x32xf32>
    tpu.vector_store %arg8[%c80, %c0_18], %26 {strides = array<i32>} : memref<160x32xf32, #tpu.memory_space<vmem>>, vector<8x32xf32>,
    %28 = vector.extract_strided_slice %9 {offsets = [0, 288], sizes = [8, 32], strides = [1, 1]} : vector<8x512xf32> to vector<8x32xf32>
    %c88 = arith.constant 88 : index
    %c0_19 = arith.constant 0 : index
    %29 = vector.load %arg8[%c88, %c0_19] : memref<160x32xf32, #tpu.memory_space<vmem>>, vector<8x32xf32>
    tpu.vector_store %arg8[%c88, %c0_19], %28 {strides = array<i32>} : memref<160x32xf32, #tpu.memory_space<vmem>>, vector<8x32xf32>,
    %30 = vector.extract_strided_slice %9 {offsets = [0, 320], sizes = [8, 32], strides = [1, 1]} : vector<8x512xf32> to vector<8x32xf32>
    %c96 = arith.constant 96 : index
    %c0_20 = arith.constant 0 : index
    %31 = vector.load %arg8[%c96, %c0_20] : memref<160x32xf32, #tpu.memory_space<vmem>>, vector<8x32xf32>
    tpu.vector_store %arg8[%c96, %c0_20], %30 {strides = array<i32>} : memref<160x32xf32, #tpu.memory_space<vmem>>, vector<8x32xf32>,
    %32 = vector.extract_strided_slice %9 {offsets = [0, 352], sizes = [8, 32], strides = [1, 1]} : vector<8x512xf32> to vector<8x32xf32>
    %c104 = arith.constant 104 : index
    %c0_21 = arith.constant 0 : index
    %33 = vector.load %arg8[%c104, %c0_21] : memref<160x32xf32, #tpu.memory_space<vmem>>, vector<8x32xf32>
    tpu.vector_store %arg8[%c104, %c0_21], %32 {strides = array<i32>} : memref<160x32xf32, #tpu.memory_space<vmem>>, vector<8x32xf32>,
    %34 = vector.extract_strided_slice %9 {offsets = [0, 384], sizes = [8, 32], strides = [1, 1]} : vector<8x512xf32> to vector<8x32xf32>
    %c112 = arith.constant 112 : index
    %c0_22 = arith.constant 0 : index
    %35 = vector.load %arg8[%c112, %c0_22] : memref<160x32xf32, #tpu.memory_space<vmem>>, vector<8x32xf32>
    tpu.vector_store %arg8[%c112, %c0_22], %34 {strides = array<i32>} : memref<160x32xf32, #tpu.memory_space<vmem>>, vector<8x32xf32>,
    %36 = vector.extract_strided_slice %9 {offsets = [0, 416], sizes = [8, 32], strides = [1, 1]} : vector<8x512xf32> to vector<8x32xf32>
    %c120 = arith.constant 120 : index
    %c0_23 = arith.constant 0 : index
    %37 = vector.load %arg8[%c120, %c0_23] : memref<160x32xf32, #tpu.memory_space<vmem>>, vector<8x32xf32>
    tpu.vector_store %arg8[%c120, %c0_23], %36 {strides = array<i32>} : memref<160x32xf32, #tpu.memory_space<vmem>>, vector<8x32xf32>,
    %38 = vector.extract_strided_slice %9 {offsets = [0, 448], sizes = [8, 32], strides = [1, 1]} : vector<8x512xf32> to vector<8x32xf32>
    %c128 = arith.constant 128 : index
    %c0_24 = arith.constant 0 : index
    %39 = vector.load %arg8[%c128, %c0_24] : memref<160x32xf32, #tpu.memory_space<vmem>>, vector<8x32xf32>
    tpu.vector_store %arg8[%c128, %c0_24], %38 {strides = array<i32>} : memref<160x32xf32, #tpu.memory_space<vmem>>, vector<8x32xf32>,
    %40 = vector.extract_strided_slice %9 {offsets = [0, 480], sizes = [8, 32], strides = [1, 1]} : vector<8x512xf32> to vector<8x32xf32>
    %c136 = arith.constant 136 : index
    %c0_25 = arith.constant 0 : index
    %41 = vector.load %arg8[%c136, %c0_25] : memref<160x32xf32, #tpu.memory_space<vmem>>, vector<8x32xf32>
    tpu.vector_store %arg8[%c136, %c0_25], %40 {strides = array<i32>} : memref<160x32xf32, #tpu.memory_space<vmem>>, vector<8x32xf32>,
    %c0_26 = arith.constant 0 : index
    %c0_27 = arith.constant 0 : index
    %42 = vector.load %arg8[%c0_26, %c0_27] : memref<160x32xf32, #tpu.memory_space<vmem>>, vector<160x32xf32>
    %cst_28 = arith.constant 0.000000e+00 : f32
    %43 = vector.broadcast %cst_28 : f32 to vector<160x32xf32>
    %44 = arith.maximumf %42, %43 : vector<160x32xf32>
    %45 = vector.extract_strided_slice %44 {offsets = [0, 0], sizes = [128, 32], strides = [1, 1]} : vector<160x32xf32> to vector<128x32xf32>
    %46 = vector.extract_strided_slice %44 {offsets = [8, 0], sizes = [128, 32], strides = [1, 1]} : vector<160x32xf32> to vector<128x32xf32>
    %47 = vector.extract_strided_slice %44 {offsets = [16, 0], sizes = [128, 32], strides = [1, 1]} : vector<160x32xf32> to vector<128x32xf32>
    %48 = vector.extract_strided_slice %44 {offsets = [24, 0], sizes = [128, 32], strides = [1, 1]} : vector<160x32xf32> to vector<128x32xf32>
    %49 = vector.extract_strided_slice %44 {offsets = [32, 0], sizes = [128, 32], strides = [1, 1]} : vector<160x32xf32> to vector<128x32xf32>
    %50 = tpu.concatenate %45, %46, %47, %48, %49 in 1 : vector<128x32xf32>, vector<128x32xf32>, vector<128x32xf32>, vector<128x32xf32>, vector<128x32xf32> -> vector<128x160xf32>
    %c0_29 = arith.constant 0 : index
    %c0_30 = arith.constant 0 : index
    %c0_31 = arith.constant 0 : index
    %51 = vector.load %arg3[%c0_29, %c0_30, %c0_31] : memref<2x160x32xf32, #tpu.memory_space<vmem>>, vector<1x160x32xf32>
    %52 = vector.shape_cast %51 : vector<1x160x32xf32> to vector<160x32xf32>
    %cst_32 = arith.constant dense<0.000000e+00> : vector<128x32xf32>
    %53 = tpu.matmul %50, %52, %cst_32 {dimension_numbers = #tpu.dot_dimension_numbers<[1], [0], [0], [1], [0, 0, 1, 1], [], []>} : vector<128x160xf32>, vector<160x32xf32>, vector<128x32xf32> -> vector<128x32xf32>
    %c0_33 = arith.constant 0 : index
    %c0_34 = arith.constant 0 : index
    %c0_35 = arith.constant 0 : index
    %54 = vector.load %arg4[%c0_33, %c0_34, %c0_35] : memref<2x1x32xf32, #tpu.memory_space<vmem>>, vector<1x1x32xf32>
    %55 = vector.shape_cast %54 : vector<1x1x32xf32> to vector<1x32xf32>
    %56 = vector.broadcast %55 : vector<1x32xf32> to vector<128x32xf32>
    %57 = arith.addf %53, %56 : vector<128x32xf32>
    %58 = vector.extract_strided_slice %42 {offsets = [16, 0], sizes = [128, 32], strides = [1, 1]} : vector<160x32xf32> to vector<128x32xf32>
    %cst_36 = arith.constant 3.000000e-01 : f32
    %59 = vector.broadcast %cst_36 : f32 to vector<128x32xf32>
    %60 = arith.mulf %59, %57 : vector<128x32xf32>
    %61 = arith.addf %58, %60 : vector<128x32xf32>
    %c16_37 = arith.constant 16 : index
    %c0_38 = arith.constant 0 : index
    %62 = vector.load %arg8[%c16_37, %c0_38] : memref<160x32xf32, #tpu.memory_space<vmem>>, vector<128x32xf32>
    tpu.vector_store %arg8[%c16_37, %c0_38], %61 {strides = array<i32>} : memref<160x32xf32, #tpu.memory_space<vmem>>, vector<128x32xf32>,
    %c0_39 = arith.constant 0 : index
    %c0_40 = arith.constant 0 : index
    %63 = vector.load %arg8[%c0_39, %c0_40] : memref<160x32xf32, #tpu.memory_space<vmem>>, vector<160x32xf32>
    %cst_41 = arith.constant 0.000000e+00 : f32
    %64 = vector.broadcast %cst_41 : f32 to vector<160x32xf32>
    %65 = arith.maximumf %63, %64 : vector<160x32xf32>
    %66 = vector.extract_strided_slice %65 {offsets = [0, 0], sizes = [128, 32], strides = [1, 1]} : vector<160x32xf32> to vector<128x32xf32>
    %67 = vector.extract_strided_slice %65 {offsets = [8, 0], sizes = [128, 32], strides = [1, 1]} : vector<160x32xf32> to vector<128x32xf32>
    %68 = vector.extract_strided_slice %65 {offsets = [16, 0], sizes = [128, 32], strides = [1, 1]} : vector<160x32xf32> to vector<128x32xf32>
    %69 = vector.extract_strided_slice %65 {offsets = [24, 0], sizes = [128, 32], strides = [1, 1]} : vector<160x32xf32> to vector<128x32xf32>
    %70 = vector.extract_strided_slice %65 {offsets = [32, 0], sizes = [128, 32], strides = [1, 1]} : vector<160x32xf32> to vector<128x32xf32>
    %71 = tpu.concatenate %66, %67, %68, %69, %70 in 1 : vector<128x32xf32>, vector<128x32xf32>, vector<128x32xf32>, vector<128x32xf32>, vector<128x32xf32> -> vector<128x160xf32>
    %c1 = arith.constant 1 : index
    %c0_42 = arith.constant 0 : index
    %c0_43 = arith.constant 0 : index
    %72 = vector.load %arg3[%c1, %c0_42, %c0_43] : memref<2x160x32xf32, #tpu.memory_space<vmem>>, vector<1x160x32xf32>
    %73 = vector.shape_cast %72 : vector<1x160x32xf32> to vector<160x32xf32>
    %cst_44 = arith.constant dense<0.000000e+00> : vector<128x32xf32>
    %74 = tpu.matmul %71, %73, %cst_44 {dimension_numbers = #tpu.dot_dimension_numbers<[1], [0], [0], [1], [0, 0, 1, 1], [], []>} : vector<128x160xf32>, vector<160x32xf32>, vector<128x32xf32> -> vector<128x32xf32>
    %c1_45 = arith.constant 1 : index
    %c0_46 = arith.constant 0 : index
    %c0_47 = arith.constant 0 : index
    %75 = vector.load %arg4[%c1_45, %c0_46, %c0_47] : memref<2x1x32xf32, #tpu.memory_space<vmem>>, vector<1x1x32xf32>
    %76 = vector.shape_cast %75 : vector<1x1x32xf32> to vector<1x32xf32>
    %77 = vector.broadcast %76 : vector<1x32xf32> to vector<128x32xf32>
    %78 = arith.addf %74, %77 : vector<128x32xf32>
    %79 = vector.extract_strided_slice %63 {offsets = [16, 0], sizes = [128, 32], strides = [1, 1]} : vector<160x32xf32> to vector<128x32xf32>
    %cst_48 = arith.constant 3.000000e-01 : f32
    %80 = vector.broadcast %cst_48 : f32 to vector<128x32xf32>
    %81 = arith.mulf %80, %78 : vector<128x32xf32>
    %82 = arith.addf %79, %81 : vector<128x32xf32>
    %c16_49 = arith.constant 16 : index
    %c0_50 = arith.constant 0 : index
    %83 = vector.load %arg8[%c16_49, %c0_50] : memref<160x32xf32, #tpu.memory_space<vmem>>, vector<128x32xf32>
    tpu.vector_store %arg8[%c16_49, %c0_50], %82 {strides = array<i32>} : memref<160x32xf32, #tpu.memory_space<vmem>>, vector<128x32xf32>,
    %c16_51 = arith.constant 16 : index
    %c0_52 = arith.constant 0 : index
    %84 = vector.load %arg8[%c16_51, %c0_52] : memref<160x32xf32, #tpu.memory_space<vmem>>, vector<128x32xf32>
    %c0_53 = arith.constant 0 : index
    %c0_54 = arith.constant 0 : index
    %85 = vector.load %arg5[%c0_53, %c0_54] : memref<32x8xf32, #tpu.memory_space<vmem>>, vector<32x8xf32>
    %cst_55 = arith.constant dense<0.000000e+00> : vector<128x8xf32>
    %86 = tpu.matmul %84, %85, %cst_55 {dimension_numbers = #tpu.dot_dimension_numbers<[1], [0], [0], [1], [0, 0, 1, 1], [], []>} : vector<128x32xf32>, vector<32x8xf32>, vector<128x8xf32> -> vector<128x8xf32>
    %c0_56 = arith.constant 0 : index
    %c0_57 = arith.constant 0 : index
    %87 = vector.load %arg6[%c0_56, %c0_57] : memref<1x8xf32, #tpu.memory_space<vmem>>, vector<1x8xf32>
    %88 = vector.broadcast %87 : vector<1x8xf32> to vector<128x8xf32>
    %89 = arith.addf %86, %88 : vector<128x8xf32>
    %cst_58 = arith.constant dense<0xFF800000> : vector<128xf32>
    %90 = vector.multi_reduction <maximumf>, %89, %cst_58 [1] : vector<128x8xf32> to vector<128xf32>
    %91 = vector.shape_cast %90 : vector<128xf32> to vector<128x1xf32>
    %92 = vector.broadcast %91 : vector<128x1xf32> to vector<128x8xf32>
    %93 = arith.subf %89, %92 : vector<128x8xf32>
    %94 = math.exp %93 : vector<128x8xf32>
    %cst_59 = arith.constant dense<0.000000e+00> : vector<128xf32>
    %95 = vector.multi_reduction <add>, %94, %cst_59 [1] : vector<128x8xf32> to vector<128xf32>
    %96 = vector.shape_cast %95 : vector<128xf32> to vector<128x1xf32>
    %97 = tpu.reciprocal %96 : vector<128x1xf32> -> vector<128x1xf32>
    %98 = vector.broadcast %97 : vector<128x1xf32> to vector<128x8xf32>
    %99 = arith.mulf %94, %98 : vector<128x8xf32>
    %c0_60 = arith.constant 0 : index
    %c0_61 = arith.constant 0 : index
    %100 = vector.load %arg7[%c0_60, %c0_61] : memref<128x8xf32, #tpu.memory_space<vmem>>, vector<128x8xf32>
    tpu.vector_store %arg7[%c0_60, %c0_61], %99 {strides = array<i32>} : memref<128x8xf32, #tpu.memory_space<vmem>>, vector<128x8xf32>,
    return
  }
}

</mosaic_0001>

<llo_original>
// kernel: generator_forward.1
$region0: #{generator_forward.1}
  #allocation0 [shape = 'u32[]', space=smem, size = 0x4, offset = 0x4, fixed_abs, tag = 'smem constant byte address 0x4 - core index']
  #allocation1 [shape = 'u32[144,128]{1,0:T(1,128)}', space=vmem, size = 0x12000, scoped, tag = 'internal scratch']
  #allocation2 [shape = 'f32[160,32]{1,0:T(8,128)}', space=vmem, size = 0x14000, scoped, tag = 'scratch operand']
  %s0 = inlined_call_operand.vmem [shape: f32[8,32], index: 0, kind: input, shape index: {}]
  %s1 = inlined_call_operand.vmem [shape: f32[32,512], index: 1, kind: input, shape index: {}]
  %s2 = inlined_call_operand.vmem [shape: f32[1,512], index: 2, kind: input, shape index: {}]
  %s3 = inlined_call_operand.vmem [shape: f32[2,160,32], index: 3, kind: input, shape index: {}]
  %s4 = inlined_call_operand.vmem [shape: f32[2,1,32], index: 4, kind: input, shape index: {}]
  %s5 = inlined_call_operand.vmem [shape: f32[32,8], index: 5, kind: input, shape index: {}]
  %s6 = inlined_call_operand.vmem [shape: f32[1,8], index: 6, kind: input, shape index: {}]
  %s7 = inlined_call_operand.vmem [shape: f32[128,8], index: 7, kind: output, shape index: {}]
  %s8 = sld [smem:[#allocation0]]
  $region38: #{generator_forward.1} parent=0
    _
  %s10 = ssub.s32 1, %s8
  %s11 = scalar_select 0, %s10, %s8
  // Predicated region
  $region2: #{generator_forward.1} parent=0 // pred_check
    _
  $region3: #{generator_forward.1} parent=0 // pred_check_branch
    %13 = sbr.rel (0) target = $region5
  $region4: #{generator_forward.1} parent=0 // pred_region
    _
  $region5: #{generator_forward.1} parent=0 // pred_fallthru
    _
  // Predicated region
  $region6: #{generator_forward.1} parent=0 // pred_check
    _
  $region7: #{generator_forward.1} parent=0 // pred_check_branch
    %15 = sbr.rel (0) target = $region9
  $region8: #{generator_forward.1} parent=0 // pred_region
    _
  $region9: #{generator_forward.1} parent=0 // pred_fallthru
    _
  // Predicated region
  $region10: #{generator_forward.1} parent=0 // pred_check
    _
  $region11: #{generator_forward.1} parent=0 // pred_check_branch
    %17 = sbr.rel (0) target = $region13
  $region12: #{generator_forward.1} parent=0 // pred_region
    _
  $region13: #{generator_forward.1} parent=0 // pred_fallthru
    _
  // Predicated region
  $region14: #{generator_forward.1} parent=0 // pred_check
    _
  $region15: #{generator_forward.1} parent=0 // pred_check_branch
    %19 = sbr.rel (0) target = $region17
  $region16: #{generator_forward.1} parent=0 // pred_region
    _
  $region17: #{generator_forward.1} parent=0 // pred_fallthru
    _
  // Predicated region
  $region18: #{generator_forward.1} parent=0 // pred_check
    _
  $region19: #{generator_forward.1} parent=0 // pred_check_branch
    %21 = sbr.rel (0) target = $region21
  $region20: #{generator_forward.1} parent=0 // pred_region
    _
  $region21: #{generator_forward.1} parent=0 // pred_fallthru
    _
  // Predicated region
  $region22: #{generator_forward.1} parent=0 // pred_check
    _
  $region23: #{generator_forward.1} parent=0 // pred_check_branch
    %23 = sbr.rel (0) target = $region25
  $region24: #{generator_forward.1} parent=0 // pred_region
    _
  $region25: #{generator_forward.1} parent=0 // pred_fallthru
    _
  // Predicated region
  $region26: #{generator_forward.1} parent=0 // pred_check
    _
  $region27: #{generator_forward.1} parent=0 // pred_check_branch
    %25 = sbr.rel (0) target = $region29
  $region28: #{generator_forward.1} parent=0 // pred_region
    _
  $region29: #{generator_forward.1} parent=0 // pred_fallthru
    _
  %vm26 = vcmask 261120
  %27 = vst.msk [vmem:[#allocation2] sm:$0xff] %vm26, 0.0
  %28 = vst.msk [vmem:[#allocation2 + $0x8] sm:$0xff] %vm26, 0.0
  %29 = vst.msk [vmem:[#allocation2 + $0x90] sm:$0xff] %vm26, 0.0
  %30 = vst.msk [vmem:[#allocation2 + $0x98] sm:$0xff] %vm26, 0.0
  %v31 = vld [vmem:[%s0] sm:$0xff]
  %v32 = vld [vmem:[%s1] sm:$0xff]
  %v33 = vld [vmem:[%s1 + $0x8] sm:$0xff]
  %v34 = vld [vmem:[%s1 + $0x10] sm:$0xff]
  %v35 = vld [vmem:[%s1 + $0x18] sm:$0xff]
  %v36 = vld [vmem:[%s1 + $0x20] sm:$0xff]
  %v37 = vld [vmem:[%s1 + $0x28] sm:$0xff]
  %v38 = vld [vmem:[%s1 + $0x30] sm:$0xff]
  %v39 = vld [vmem:[%s1 + $0x38] sm:$0xff]
  %v40 = vld [vmem:[%s1 + $0x40] sm:$0xff]
  %v41 = vld [vmem:[%s1 + $0x48] sm:$0xff]
  %v42 = vld [vmem:[%s1 + $0x50] sm:$0xff]
  %v43 = vld [vmem:[%s1 + $0x58] sm:$0xff]
  %v44 = vld [vmem:[%s1 + $0x60] sm:$0xff]
  %v45 = vld [vmem:[%s1 + $0x68] sm:$0xff]
  %v46 = vld [vmem:[%s1 + $0x70] sm:$0xff]
  %v47 = vld [vmem:[%s1 + $0x78] sm:$0xff]
  %v48 = vld [vmem:[%s2] sm:$0xf]
  %v50 = vlaneseq
  %v51 = vshrl.u32 %v50, 7
  %v52 = vsub.s32 0, %v51
  %v53 = vrot.slane %v48, %v52
  %v54 = vlaneseq
  %v55 = vshrl.u32 %v54, 7
  %v56 = vsub.s32 1, %v55
  %v57 = vrot.slane %v48, %v56
  %v58 = vlaneseq
  %v59 = vshrl.u32 %v58, 7
  %v60 = vsub.s32 2, %v59
  %v61 = vrot.slane %v48, %v60
  %v62 = vlaneseq
  %v63 = vshrl.u32 %v62, 7
  %v64 = vsub.s32 3, %v63
  %v65 = vrot.slane %v48, %v64
  %v71 = vsel %vm26, %v31, 0
  %73 = vmatprep.subr.mxu0 0.0
  %74 = vmatpush1.msra.mxu0 0.0
  %75 = vmatprep.subr.mxu0 0.0
  %76 = vmatpush1.msra.mxu0 0.0
  %77 = vmatprep.subr.mxu0 0.0
  %78 = vmatpush1.msra.mxu0 0.0
  %79 = vmatprep.subr.mxu0 0.0
  %80 = vmatpush1.msra.mxu0 0.0
  %81 = vmatprep.subr.mxu0 0.0
  %82 = vmatpush1.msra.mxu0 0.0
  %83 = vmatprep.subr.mxu0 0.0
  %84 = vmatpush1.msra.mxu0 0.0
  %85 = vmatprep.subr.mxu0 0.0
  %86 = vmatpush1.msra.mxu0 0.0
  %87 = vmatprep.subr.mxu0 0.0
  %88 = vmatpush1.msra.mxu0 0.0
  %89 = vmatprep.subr.mxu0 0.0
  %90 = vmatpush1.msra.mxu0 0.0
  %91 = vmatprep.subr.mxu0 0.0
  %92 = vmatpush1.msra.mxu0 0.0
  %93 = vmatprep.subr.mxu0 0.0
  %94 = vmatpush1.msra.mxu0 0.0
  %95 = vmatprep.subr.mxu0 0.0
  %96 = vmatpush1.msra.mxu0 0.0
  %97 = vmatprep.subr.mxu0 %v45
  %98 = vmatpush1.msra.mxu0 %v44
  %99 = vmatprep.subr.mxu0 %v41
  %100 = vmatpush1.msra.mxu0 %v40
  %101 = vmatprep.subr.mxu0 %v37
  %102 = vmatpush1.msra.mxu0 %v36
  %103 = vmatprep.subr.mxu0 %v33
  %104 = vmatpush1.msra.mxu0 %v32
  %105 = vmatprep.subr.mxu0 0.0
  %106 = vmatpush2.msra.mxu0 0.0
  %107 = vmatprep.subr.mxu0 0.0
  %108 = vmatpush2.msra.mxu0 0.0
  %109 = vmatprep.subr.mxu0 0.0
  %110 = vmatpush2.msra.mxu0 0.0
  %111 = vmatprep.subr.mxu0 0.0
  %112 = vmatpush2.msra.mxu0 0.0
  %113 = vmatprep.subr.mxu0 0.0
  %114 = vmatpush2.msra.mxu0 0.0
  %115 = vmatprep.subr.mxu0 0.0
  %116 = vmatpush2.msra.mxu0 0.0
  %117 = vmatprep.subr.mxu0 0.0
  %118 = vmatpush2.msra.mxu0 0.0
  %119 = vmatprep.subr.mxu0 0.0
  %120 = vmatpush2.msra.mxu0 0.0
  %121 = vmatprep.subr.mxu0 0.0
  %122 = vmatpush2.msra.mxu0 0.0
  %123 = vmatprep.subr.mxu0 0.0
  %124 = vmatpush2.msra.mxu0 0.0
  %125 = vmatprep.subr.mxu0 0.0
  %126 = vmatpush2.msra.mxu0 0.0
  %127 = vmatprep.subr.mxu0 0.0
  %128 = vmatpush2.msra.mxu0 0.0
  %129 = vmatprep.subr.mxu0 0.0
  %130 = vmatpush2.msra.mxu0 0.0
  %131 = vmatprep.subr.mxu0 0.0
  %132 = vmatpush2.msra.mxu0 0.0
  %133 = vmatprep.subr.mxu0 0.0
  %134 = vmatpush2.msra.mxu0 0.0
  %135 = vmatprep.subr.mxu0 0.0
  %136 = vmatpush2.msra.mxu0 0.0
  %137 = vmatprep.mubr.f32.mxu0 0.0
  %138 = vmatmul.mubr.f32.gmra.mxu0 %v71
  %v139 = vpop.f32.mrf.mxu0
  %v140 = vadd.f32 %v53, %v139
  %v141 = vpop.f32.mrf.mxu0
  %v142 = vadd.f32 %v57, %v141
  %143 = vdwg.mxu0
  %144 = vmatprep.subr.mxu0 0.0
  %145 = vmatpush1.msra.mxu0 0.0
  %146 = vmatprep.subr.mxu0 0.0
  %147 = vmatpush1.msra.mxu0 0.0
  %148 = vmatprep.subr.mxu0 0.0
  %149 = vmatpush1.msra.mxu0 0.0
  %150 = vmatprep.subr.mxu0 0.0
  %151 = vmatpush1.msra.mxu0 0.0
  %152 = vmatprep.subr.mxu0 0.0
  %153 = vmatpush1.msra.mxu0 0.0
  %154 = vmatprep.subr.mxu0 0.0
  %155 = vmatpush1.msra.mxu0 0.0
  %156 = vmatprep.subr.mxu0 0.0
  %157 = vmatpush1.msra.mxu0 0.0
  %158 = vmatprep.subr.mxu0 0.0
  %159 = vmatpush1.msra.mxu0 0.0
  %160 = vmatprep.subr.mxu0 0.0
  %161 = vmatpush1.msra.mxu0 0.0
  %162 = vmatprep.subr.mxu0 0.0
  %163 = vmatpush1.msra.mxu0 0.0
  %164 = vmatprep.subr.mxu0 0.0
  %165 = vmatpush1.msra.mxu0 0.0
  %166 = vmatprep.subr.mxu0 0.0
  %167 = vmatpush1.msra.mxu0 0.0
  %168 = vmatprep.subr.mxu0 %v47
  %169 = vmatpush1.msra.mxu0 %v46
  %170 = vmatprep.subr.mxu0 %v43
  %171 = vmatpush1.msra.mxu0 %v42
  %172 = vmatprep.subr.mxu0 %v39
  %173 = vmatpush1.msra.mxu0 %v38
  %174 = vmatprep.subr.mxu0 %v35
  %175 = vmatpush1.msra.mxu0 %v34
  %176 = vmatprep.subr.mxu0 0.0
  %177 = vmatpush2.msra.mxu0 0.0
  %178 = vmatprep.subr.mxu0 0.0
  %179 = vmatpush2.msra.mxu0 0.0
  %180 = vmatprep.subr.mxu0 0.0
  %181 = vmatpush2.msra.mxu0 0.0
  %182 = vmatprep.subr.mxu0 0.0
  %183 = vmatpush2.msra.mxu0 0.0
  %184 = vmatprep.subr.mxu0 0.0
  %185 = vmatpush2.msra.mxu0 0.0
  %186 = vmatprep.subr.mxu0 0.0
  %187 = vmatpush2.msra.mxu0 0.0
  %188 = vmatprep.subr.mxu0 0.0
  %189 = vmatpush2.msra.mxu0 0.0
  %190 = vmatprep.subr.mxu0 0.0
  %191 = vmatpush2.msra.mxu0 0.0
  %192 = vmatprep.subr.mxu0 0.0
  %193 = vmatpush2.msra.mxu0 0.0
  %194 = vmatprep.subr.mxu0 0.0
  %195 = vmatpush2.msra.mxu0 0.0
  %196 = vmatprep.subr.mxu0 0.0
  %197 = vmatpush2.msra.mxu0 0.0
  %198 = vmatprep.subr.mxu0 0.0
  %199 = vmatpush2.msra.mxu0 0.0
  %200 = vmatprep.subr.mxu0 0.0
  %201 = vmatpush2.msra.mxu0 0.0
  %202 = vmatprep.subr.mxu0 0.0
  %203 = vmatpush2.msra.mxu0 0.0
  %204 = vmatprep.subr.mxu0 0.0
  %205 = vmatpush2.msra.mxu0 0.0
  %206 = vmatprep.subr.mxu0 0.0
  %207 = vmatpush2.msra.mxu0 0.0
  %208 = vmatprep.mubr.f32.mxu0 0.0
  %209 = vmatmul.mubr.f32.gmra.mxu0 %v71
  %v210 = vpop.f32.mrf.mxu0
  %v211 = vadd.f32 %v61, %v210
  %v212 = vpop.f32.mrf.mxu0
  %v213 = vadd.f32 %v65, %v212
  %214 = vdwg.mxu0
  %215 = vst.msk [vmem:[#allocation2 + $0x10] sm:$0xff] %vm26, %v140
  %217 = vrot.lane.b32.xlu0 %v140, 96
  %v218 = vpop.permute.xlu0 %217
  %220 = vst.msk [vmem:[#allocation2 + $0x18] sm:$0xff] %vm26, %v218
  %221 = vrot.lane.b32.xlu0 %v140, 64
  %v222 = vpop.permute.xlu0 %221
  %224 = vst.msk [vmem:[#allocation2 + $0x20] sm:$0xff] %vm26, %v222
  %225 = vrot.lane.b32.xlu0 %v140, 32
  %v226 = vpop.permute.xlu0 %225
  %228 = vst.msk [vmem:[#allocation2 + $0x28] sm:$0xff] %vm26, %v226
  %229 = vst.msk [vmem:[#allocation2 + $0x30] sm:$0xff] %vm26, %v142
  %231 = vrot.lane.b32.xlu0 %v142, 96
  %v232 = vpop.permute.xlu0 %231
  %234 = vst.msk [vmem:[#allocation2 + $0x38] sm:$0xff] %vm26, %v232
  %235 = vrot.lane.b32.xlu0 %v142, 64
  %v236 = vpop.permute.xlu0 %235
  %238 = vst.msk [vmem:[#allocation2 + $0x40] sm:$0xff] %vm26, %v236
  %239 = vrot.lane.b32.xlu0 %v142, 32
  %v240 = vpop.permute.xlu0 %239
  %242 = vst.msk [vmem:[#allocation2 + $0x48] sm:$0xff] %vm26, %v240
  %243 = vst.msk [vmem:[#allocation2 + $0x50] sm:$0xff] %vm26, %v211
  %245 = vrot.lane.b32.xlu0 %v211, 96
  %v246 = vpop.permute.xlu0 %245
  %248 = vst.msk [vmem:[#allocation2 + $0x58] sm:$0xff] %vm26, %v246
  %249 = vrot.lane.b32.xlu0 %v211, 64
  %v250 = vpop.permute.xlu0 %249
  %252 = vst.msk [vmem:[#allocation2 + $0x60] sm:$0xff] %vm26, %v250
  %253 = vrot.lane.b32.xlu0 %v211, 32
  %v254 = vpop.permute.xlu0 %253
  %256 = vst.msk [vmem:[#allocation2 + $0x68] sm:$0xff] %vm26, %v254
  %257 = vst.msk [vmem:[#allocation2 + $0x70] sm:$0xff] %vm26, %v213
  %259 = vrot.lane.b32.xlu0 %v213, 96
  %v260 = vpop.permute.xlu0 %259
  %262 = vst.msk [vmem:[#allocation2 + $0x78] sm:$0xff] %vm26, %v260
  %263 = vrot.lane.b32.xlu0 %v213, 64
  %v264 = vpop.permute.xlu0 %263
  %266 = vst.msk [vmem:[#allocation2 + $0x80] sm:$0xff] %vm26, %v264
  %267 = vrot.lane.b32.xlu0 %v213, 32
  %v268 = vpop.permute.xlu0 %267
  %270 = vst.msk [vmem:[#allocation2 + $0x88] sm:$0xff] %vm26, %v268
  %v271 = vld [vmem:[#allocation2] sm:$0xff]
  %v272 = vld [vmem:[#allocation2 + $0x8] sm:$0xff]
  %v273 = vld [vmem:[#allocation2 + $0x10] sm:$0xff]
  %v274 = vld [vmem:[#allocation2 + $0x18] sm:$0xff]
  %v275 = vld [vmem:[#allocation2 + $0x20] sm:$0xff]
  %v276 = vld [vmem:[#allocation2 + $0x28] sm:$0xff]
  %v277 = vld [vmem:[#allocation2 + $0x30] sm:$0xff]
  %v278 = vld [vmem:[#allocation2 + $0x38] sm:$0xff]
  %v279 = vld [vmem:[#allocation2 + $0x40] sm:$0xff]
  %v280 = vld [vmem:[#allocation2 + $0x48] sm:$0xff]
  %v281 = vld [vmem:[#allocation2 + $0x50] sm:$0xff]
  %v282 = vld [vmem:[#allocation2 + $0x58] sm:$0xff]
  %v283 = vld [vmem:[#allocation2 + $0x60] sm:$0xff]
  %v284 = vld [vmem:[#allocation2 + $0x68] sm:$0xff]
  %v285 = vld [vmem:[#allocation2 + $0x70] sm:$0xff]
  %v286 = vld [vmem:[#allocation2 + $0x78] sm:$0xff]
  %v287 = vld [vmem:[#allocation2 + $0x80] sm:$0xff]
  %v288 = vld [vmem:[#allocation2 + $0x88] sm:$0xff]
  %v289 = vld [vmem:[#allocation2 + $0x90] sm:$0xff]
  %v290 = vld [vmem:[#allocation2 + $0x98] sm:$0xff]
  %v291 = vmax.f32 %v271, 0.0
  %v292 = vmax.f32 %v272, 0.0
  %v293 = vmax.f32 %v273, 0.0
  %v294 = vmax.f32 %v274, 0.0
  %v295 = vmax.f32 %v275, 0.0
  %v296 = vmax.f32 %v276, 0.0
  %v297 = vmax.f32 %v277, 0.0
  %v298 = vmax.f32 %v278, 0.0
  %v299 = vmax.f32 %v279, 0.0
  %v300 = vmax.f32 %v280, 0.0
  %v301 = vmax.f32 %v281, 0.0
  %v302 = vmax.f32 %v282, 0.0
  %v303 = vmax.f32 %v283, 0.0
  %v304 = vmax.f32 %v284, 0.0
  %v305 = vmax.f32 %v285, 0.0
  %v306 = vmax.f32 %v286, 0.0
  %v307 = vmax.f32 %v287, 0.0
  %v308 = vmax.f32 %v288, 0.0
  %v309 = vmax.f32 %v289, 0.0
  %v310 = vmax.f32 %v290, 0.0
  %327 = vrot.lane.b32.xlu0 %v292, 32
  %v328 = vpop.permute.xlu0 %327
  %329 = vrot.lane.b32.xlu0 %v293, 32
  %v330 = vpop.permute.xlu0 %329
  %331 = vrot.lane.b32.xlu0 %v294, 32
  %v332 = vpop.permute.xlu0 %331
  %333 = vrot.lane.b32.xlu0 %v295, 32
  %v334 = vpop.permute.xlu0 %333
  %335 = vrot.lane.b32.xlu0 %v296, 32
  %v336 = vpop.permute.xlu0 %335
  %337 = vrot.lane.b32.xlu0 %v297, 32
  %v338 = vpop.permute.xlu0 %337
  %339 = vrot.lane.b32.xlu0 %v298, 32
  %v340 = vpop.permute.xlu0 %339
  %341 = vrot.lane.b32.xlu0 %v299, 32
  %v342 = vpop.permute.xlu0 %341
  %343 = vrot.lane.b32.xlu0 %v300, 32
  %v344 = vpop.permute.xlu0 %343
  %345 = vrot.lane.b32.xlu0 %v301, 32
  %v346 = vpop.permute.xlu0 %345
  %347 = vrot.lane.b32.xlu0 %v302, 32
  %v348 = vpop.permute.xlu0 %347
  %349 = vrot.lane.b32.xlu0 %v303, 32
  %v350 = vpop.permute.xlu0 %349
  %351 = vrot.lane.b32.xlu0 %v304, 32
  %v352 = vpop.permute.xlu0 %351
  %353 = vrot.lane.b32.xlu0 %v305, 32
  %v354 = vpop.permute.xlu0 %353
  %355 = vrot.lane.b32.xlu0 %v306, 32
  %v356 = vpop.permute.xlu0 %355
  %357 = vrot.lane.b32.xlu0 %v307, 32
  %v358 = vpop.permute.xlu0 %357
  %376 = vrot.lane.b32.xlu0 %v293, 64
  %v377 = vpop.permute.xlu0 %376
  %378 = vrot.lane.b32.xlu0 %v294, 64
  %v379 = vpop.permute.xlu0 %378
  %380 = vrot.lane.b32.xlu0 %v295, 64
  %v381 = vpop.permute.xlu0 %380
  %382 = vrot.lane.b32.xlu0 %v296, 64
  %v383 = vpop.permute.xlu0 %382
  %384 = vrot.lane.b32.xlu0 %v297, 64
  %v385 = vpop.permute.xlu0 %384
  %386 = vrot.lane.b32.xlu0 %v298, 64
  %v387 = vpop.permute.xlu0 %386
  %388 = vrot.lane.b32.xlu0 %v299, 64
  %v389 = vpop.permute.xlu0 %388
  %390 = vrot.lane.b32.xlu0 %v300, 64
  %v391 = vpop.permute.xlu0 %390
  %392 = vrot.lane.b32.xlu0 %v301, 64
  %v393 = vpop.permute.xlu0 %392
  %394 = vrot.lane.b32.xlu0 %v302, 64
  %v395 = vpop.permute.xlu0 %394
  %396 = vrot.lane.b32.xlu0 %v303, 64
  %v397 = vpop.permute.xlu0 %396
  %398 = vrot.lane.b32.xlu0 %v304, 64
  %v399 = vpop.permute.xlu0 %398
  %400 = vrot.lane.b32.xlu0 %v305, 64
  %v401 = vpop.permute.xlu0 %400
  %402 = vrot.lane.b32.xlu0 %v306, 64
  %v403 = vpop.permute.xlu0 %402
  %404 = vrot.lane.b32.xlu0 %v307, 64
  %v405 = vpop.permute.xlu0 %404
  %406 = vrot.lane.b32.xlu0 %v308, 64
  %v407 = vpop.permute.xlu0 %406
  %425 = vrot.lane.b32.xlu0 %v294, 96
  %v426 = vpop.permute.xlu0 %425
  %427 = vrot.lane.b32.xlu0 %v295, 96
  %v428 = vpop.permute.xlu0 %427
  %429 = vrot.lane.b32.xlu0 %v296, 96
  %v430 = vpop.permute.xlu0 %429
  %431 = vrot.lane.b32.xlu0 %v297, 96
  %v432 = vpop.permute.xlu0 %431
  %433 = vrot.lane.b32.xlu0 %v298, 96
  %v434 = vpop.permute.xlu0 %433
  %435 = vrot.lane.b32.xlu0 %v299, 96
  %v436 = vpop.permute.xlu0 %435
  %437 = vrot.lane.b32.xlu0 %v300, 96
  %v438 = vpop.permute.xlu0 %437
  %439 = vrot.lane.b32.xlu0 %v301, 96
  %v440 = vpop.permute.xlu0 %439
  %441 = vrot.lane.b32.xlu0 %v302, 96
  %v442 = vpop.permute.xlu0 %441
  %443 = vrot.lane.b32.xlu0 %v303, 96
  %v444 = vpop.permute.xlu0 %443
  %445 = vrot.lane.b32.xlu0 %v304, 96
  %v446 = vpop.permute.xlu0 %445
  %447 = vrot.lane.b32.xlu0 %v305, 96
  %v448 = vpop.permute.xlu0 %447
  %449 = vrot.lane.b32.xlu0 %v306, 96
  %v450 = vpop.permute.xlu0 %449
  %451 = vrot.lane.b32.xlu0 %v307, 96
  %v452 = vpop.permute.xlu0 %451
  %453 = vrot.lane.b32.xlu0 %v308, 96
  %v454 = vpop.permute.xlu0 %453
  %455 = vrot.lane.b32.xlu0 %v309, 96
  %v456 = vpop.permute.xlu0 %455
  %v473 = vsel %vm26, %v291, %v328
  %v474 = vsel %vm26, %v292, %v330
  %v475 = vsel %vm26, %v293, %v332
  %v476 = vsel %vm26, %v294, %v334
  %v477 = vsel %vm26, %v295, %v336
  %v478 = vsel %vm26, %v296, %v338
  %v479 = vsel %vm26, %v297, %v340
  %v480 = vsel %vm26, %v298, %v342
  %v481 = vsel %vm26, %v299, %v344
  %v482 = vsel %vm26, %v300, %v346
  %v483 = vsel %vm26, %v301, %v348
  %v484 = vsel %vm26, %v302, %v350
  %v485 = vsel %vm26, %v303, %v352
  %v486 = vsel %vm26, %v304, %v354
  %v487 = vsel %vm26, %v305, %v356
  %v488 = vsel %vm26, %v306, %v358
  %vm489 = vcmask 523264
  %v490 = vsel %vm489, %v473, %v377
  %v491 = vsel %vm489, %v474, %v379
  %v492 = vsel %vm489, %v475, %v381
  %v493 = vsel %vm489, %v476, %v383
  %v494 = vsel %vm489, %v477, %v385
  %v495 = vsel %vm489, %v478, %v387
  %v496 = vsel %vm489, %v479, %v389
  %v497 = vsel %vm489, %v480, %v391
  %v498 = vsel %vm489, %v481, %v393
  %v499 = vsel %vm489, %v482, %v395
  %v500 = vsel %vm489, %v483, %v397
  %v501 = vsel %vm489, %v484, %v399
  %v502 = vsel %vm489, %v485, %v401
  %v503 = vsel %vm489, %v486, %v403
  %v504 = vsel %vm489, %v487, %v405
  %v505 = vsel %vm489, %v488, %v407
  %vm506 = vcmask 785408
  %v507 = vsel %vm506, %v490, %v426
  %v508 = vsel %vm506, %v491, %v428
  %v509 = vsel %vm506, %v492, %v430
  %v510 = vsel %vm506, %v493, %v432
  %v511 = vsel %vm506, %v494, %v434
  %v512 = vsel %vm506, %v495, %v436
  %v513 = vsel %vm506, %v496, %v438
  %v514 = vsel %vm506, %v497, %v440
  %v515 = vsel %vm506, %v498, %v442
  %v516 = vsel %vm506, %v499, %v444
  %v517 = vsel %vm506, %v500, %v446
  %v518 = vsel %vm506, %v501, %v448
  %v519 = vsel %vm506, %v502, %v450
  %v520 = vsel %vm506, %v503, %v452
  %v521 = vsel %vm506, %v504, %v454
  %v522 = vsel %vm506, %v505, %v456
  %v523 = vld [vmem:[%s3] sm:$0xff]
  %v524 = vld [vmem:[%s3 + $0x8] sm:$0xff]
  %v525 = vld [vmem:[%s3 + $0x10] sm:$0xff]
  %v526 = vld [vmem:[%s3 + $0x18] sm:$0xff]
  %v527 = vld [vmem:[%s3 + $0x20] sm:$0xff]
  %v528 = vld [vmem:[%s3 + $0x28] sm:$0xff]
  %v529 = vld [vmem:[%s3 + $0x30] sm:$0xff]
  %v530 = vld [vmem:[%s3 + $0x38] sm:$0xff]
  %v531 = vld [vmem:[%s3 + $0x40] sm:$0xff]
  %v532 = vld [vmem:[%s3 + $0x48] sm:$0xff]
  %v533 = vld [vmem:[%s3 + $0x50] sm:$0xff]
  %v534 = vld [vmem:[%s3 + $0x58] sm:$0xff]
  %v535 = vld [vmem:[%s3 + $0x60] sm:$0xff]
  %v536 = vld [vmem:[%s3 + $0x68] sm:$0xff]
  %v537 = vld [vmem:[%s3 + $0x70] sm:$0xff]
  %v538 = vld [vmem:[%s3 + $0x78] sm:$0xff]
  %v539 = vld [vmem:[%s3 + $0x80] sm:$0xff]
  %v540 = vld [vmem:[%s3 + $0x88] sm:$0xff]
  %v541 = vld [vmem:[%s3 + $0x90] sm:$0xff]
  %v542 = vld [vmem:[%s3 + $0x98] sm:$0xff]
  %v543 = vld [vmem:[%s4] sm:$0x1]
  %v545 = vlaneseq
  %v546 = vshrl.u32 %v545, 7
  %v547 = vsub.s32 0, %v546
  %v548 = vrot.slane %v543, %v547
  %v550 = vsel %vm26, %v295, 0
  %v552 = vsel %vm26, %v296, 0
  %v554 = vsel %vm26, %v297, 0
  %v556 = vsel %vm26, %v298, 0
  %v558 = vsel %vm26, %v299, 0
  %v560 = vsel %vm26, %v300, 0
  %v562 = vsel %vm26, %v301, 0
  %v564 = vsel %vm26, %v302, 0
  %v566 = vsel %vm26, %v303, 0
  %v568 = vsel %vm26, %v304, 0
  %v570 = vsel %vm26, %v305, 0
  %v572 = vsel %vm26, %v306, 0
  %v574 = vsel %vm26, %v307, 0
  %v576 = vsel %vm26, %v308, 0
  %v578 = vsel %vm26, %v309, 0
  %v581 = vsel %vm26, %v310, 0
  %583 = vmatprep.subr.mxu0 0.0
  %584 = vmatpush1.msra.mxu0 %v538
  %585 = vmatprep.subr.mxu0 0.0
  %586 = vmatpush1.msra.mxu0 %v537
  %587 = vmatprep.subr.mxu0 0.0
  %588 = vmatpush1.msra.mxu0 %v536
  %589 = vmatprep.subr.mxu0 0.0
  %590 = vmatpush1.msra.mxu0 %v535
  %591 = vmatprep.subr.mxu0 0.0
  %592 = vmatpush1.msra.mxu0 %v534
  %593 = vmatprep.subr.mxu0 0.0
  %594 = vmatpush1.msra.mxu0 %v533
  %595 = vmatprep.subr.mxu0 0.0
  %596 = vmatpush1.msra.mxu0 %v532
  %597 = vmatprep.subr.mxu0 0.0
  %598 = vmatpush1.msra.mxu0 %v531
  %599 = vmatprep.subr.mxu0 0.0
  %600 = vmatpush1.msra.mxu0 %v530
  %601 = vmatprep.subr.mxu0 0.0
  %602 = vmatpush1.msra.mxu0 %v529
  %603 = vmatprep.subr.mxu0 0.0
  %604 = vmatpush1.msra.mxu0 %v528
  %605 = vmatprep.subr.mxu0 0.0
  %606 = vmatpush1.msra.mxu0 %v527
  %607 = vmatprep.subr.mxu0 0.0
  %608 = vmatpush1.msra.mxu0 %v526
  %609 = vmatprep.subr.mxu0 0.0
  %610 = vmatpush1.msra.mxu0 %v525
  %611 = vmatprep.subr.mxu0 0.0
  %612 = vmatpush1.msra.mxu0 %v524
  %613 = vmatprep.subr.mxu0 0.0
  %614 = vmatpush1.msra.mxu0 %v523
  %615 = vmatprep.subr.mxu0 0.0
  %616 = vmatpush2.msra.mxu0 0.0
  %617 = vmatprep.subr.mxu0 0.0
  %618 = vmatpush2.msra.mxu0 0.0
  %619 = vmatprep.subr.mxu0 0.0
  %620 = vmatpush2.msra.mxu0 0.0
  %621 = vmatprep.subr.mxu0 0.0
  %622 = vmatpush2.msra.mxu0 0.0
  %623 = vmatprep.subr.mxu0 0.0
  %624 = vmatpush2.msra.mxu0 0.0
  %625 = vmatprep.subr.mxu0 0.0
  %626 = vmatpush2.msra.mxu0 0.0
  %627 = vmatprep.subr.mxu0 0.0
  %628 = vmatpush2.msra.mxu0 0.0
  %629 = vmatprep.subr.mxu0 0.0
  %630 = vmatpush2.msra.mxu0 0.0
  %631 = vmatprep.subr.mxu0 0.0
  %632 = vmatpush2.msra.mxu0 0.0
  %633 = vmatprep.subr.mxu0 0.0
  %634 = vmatpush2.msra.mxu0 0.0
  %635 = vmatprep.subr.mxu0 0.0
  %636 = vmatpush2.msra.mxu0 0.0
  %637 = vmatprep.subr.mxu0 0.0
  %638 = vmatpush2.msra.mxu0 0.0
  %639 = vmatprep.subr.mxu0 0.0
  %640 = vmatpush2.msra.mxu0 %v542
  %641 = vmatprep.subr.mxu0 0.0
  %642 = vmatpush2.msra.mxu0 %v541
  %643 = vmatprep.subr.mxu0 0.0
  %644 = vmatpush2.msra.mxu0 %v540
  %645 = vmatprep.subr.mxu0 0.0
  %646 = vmatpush2.msra.mxu0 %v539
  %647 = vmatprep.mubr.f32.mxu0 %v550
  %648 = vmatmul.mubr.f32.gmra.mxu0 %v507
  %v649 = vpop.f32.mrf.mxu0
  %v650 = vadd.f32 %v548, %v649
  %v651 = vpop.f32.mrf.mxu0
  %652 = vmatprep.mubr.f32.mxu0 %v552
  %653 = vmatmul.mubr.f32.gmra.mxu0 %v508
  %v654 = vpop.f32.mrf.mxu0
  %v655 = vadd.f32 %v548, %v654
  %v656 = vpop.f32.mrf.mxu0
  %657 = vmatprep.mubr.f32.mxu0 %v554
  %658 = vmatmul.mubr.f32.gmra.mxu0 %v509
  %v659 = vpop.f32.mrf.mxu0
  %v660 = vadd.f32 %v548, %v659
  %v661 = vpop.f32.mrf.mxu0
  %662 = vmatprep.mubr.f32.mxu0 %v556
  %663 = vmatmul.mubr.f32.gmra.mxu0 %v510
  %v664 = vpop.f32.mrf.mxu0
  %v665 = vadd.f32 %v548, %v664
  %v666 = vpop.f32.mrf.mxu0
  %667 = vmatprep.mubr.f32.mxu0 %v558
  %668 = vmatmul.mubr.f32.gmra.mxu0 %v511
  %v669 = vpop.f32.mrf.mxu0
  %v670 = vadd.f32 %v548, %v669
  %v671 = vpop.f32.mrf.mxu0
  %672 = vmatprep.mubr.f32.mxu0 %v560
  %673 = vmatmul.mubr.f32.gmra.mxu0 %v512
  %v674 = vpop.f32.mrf.mxu0
  %v675 = vadd.f32 %v548, %v674
  %v676 = vpop.f32.mrf.mxu0
  %677 = vmatprep.mubr.f32.mxu0 %v562
  %678 = vmatmul.mubr.f32.gmra.mxu0 %v513
  %v679 = vpop.f32.mrf.mxu0
  %v680 = vadd.f32 %v548, %v679
  %v681 = vpop.f32.mrf.mxu0
  %682 = vmatprep.mubr.f32.mxu0 %v564
  %683 = vmatmul.mubr.f32.gmra.mxu0 %v514
  %v684 = vpop.f32.mrf.mxu0
  %v685 = vadd.f32 %v548, %v684
  %v686 = vpop.f32.mrf.mxu0
  %687 = vmatprep.mubr.f32.mxu0 %v566
  %688 = vmatmul.mubr.f32.gmra.mxu0 %v515
  %v689 = vpop.f32.mrf.mxu0
  %v690 = vadd.f32 %v548, %v689
  %v691 = vpop.f32.mrf.mxu0
  %692 = vmatprep.mubr.f32.mxu0 %v568
  %693 = vmatmul.mubr.f32.gmra.mxu0 %v516
  %v694 = vpop.f32.mrf.mxu0
  %v695 = vadd.f32 %v548, %v694
  %v696 = vpop.f32.mrf.mxu0
  %697 = vmatprep.mubr.f32.mxu0 %v570
  %698 = vmatmul.mubr.f32.gmra.mxu0 %v517
  %v699 = vpop.f32.mrf.mxu0
  %v700 = vadd.f32 %v548, %v699
  %v701 = vpop.f32.mrf.mxu0
  %702 = vmatprep.mubr.f32.mxu0 %v572
  %703 = vmatmul.mubr.f32.gmra.mxu0 %v518
  %v704 = vpop.f32.mrf.mxu0
  %v705 = vadd.f32 %v548, %v704
  %v706 = vpop.f32.mrf.mxu0
  %707 = vmatprep.mubr.f32.mxu0 %v574
  %708 = vmatmul.mubr.f32.gmra.mxu0 %v519
  %v709 = vpop.f32.mrf.mxu0
  %v710 = vadd.f32 %v548, %v709
  %v711 = vpop.f32.mrf.mxu0
  %712 = vmatprep.mubr.f32.mxu0 %v576
  %713 = vmatmul.mubr.f32.gmra.mxu0 %v520
  %v714 = vpop.f32.mrf.mxu0
  %v715 = vadd.f32 %v548, %v714
  %v716 = vpop.f32.mrf.mxu0
  %717 = vmatprep.mubr.f32.mxu0 %v578
  %718 = vmatmul.mubr.f32.gmra.mxu0 %v521
  %v719 = vpop.f32.mrf.mxu0
  %v720 = vadd.f32 %v548, %v719
  %v721 = vpop.f32.mrf.mxu0
  %722 = vmatprep.mubr.f32.mxu0 %v581
  %723 = vmatmul.mubr.f32.gmra.mxu0 %v522
  %v724 = vpop.f32.mrf.mxu0
  %v725 = vadd.f32 %v548, %v724
  %v726 = vpop.f32.mrf.mxu0
  %727 = vdwg.mxu0
  %v728 = vmul.f32 %v650, 0.3
  %v729 = vmul.f32 %v655, 0.3
  %v730 = vmul.f32 %v660, 0.3
  %v731 = vmul.f32 %v665, 0.3
  %v732 = vmul.f32 %v670, 0.3
  %v733 = vmul.f32 %v675, 0.3
  %v734 = vmul.f32 %v680, 0.3
  %v735 = vmul.f32 %v685, 0.3
  %v736 = vmul.f32 %v690, 0.3
  %v737 = vmul.f32 %v695, 0.3
  %v738 = vmul.f32 %v700, 0.3
  %v739 = vmul.f32 %v705, 0.3
  %v740 = vmul.f32 %v710, 0.3
  %v741 = vmul.f32 %v715, 0.3
  %v742 = vmul.f32 %v720, 0.3
  %v743 = vmul.f32 %v725, 0.3
  %v744 = vadd.f32 %v273, %v728
  %v745 = vadd.f32 %v274, %v729
  %v746 = vadd.f32 %v275, %v730
  %v747 = vadd.f32 %v276, %v731
  %v748 = vadd.f32 %v277, %v732
  %v749 = vadd.f32 %v278, %v733
  %v750 = vadd.f32 %v279, %v734
  %v751 = vadd.f32 %v280, %v735
  %v752 = vadd.f32 %v281, %v736
  %v753 = vadd.f32 %v282, %v737
  %v754 = vadd.f32 %v283, %v738
  %v755 = vadd.f32 %v284, %v739
  %v756 = vadd.f32 %v285, %v740
  %v757 = vadd.f32 %v286, %v741
  %v758 = vadd.f32 %v287, %v742
  %v759 = vadd.f32 %v288, %v743
  %760 = vst.msk [vmem:[#allocation2 + $0x10] sm:$0xff] %vm26, %v744
  %761 = vst.msk [vmem:[#allocation2 + $0x18] sm:$0xff] %vm26, %v745
  %762 = vst.msk [vmem:[#allocation2 + $0x20] sm:$0xff] %vm26, %v746
  %763 = vst.msk [vmem:[#allocation2 + $0x28] sm:$0xff] %vm26, %v747
  %764 = vst.msk [vmem:[#allocation2 + $0x30] sm:$0xff] %vm26, %v748
  %765 = vst.msk [vmem:[#allocation2 + $0x38] sm:$0xff] %vm26, %v749
  %766 = vst.msk [vmem:[#allocation2 + $0x40] sm:$0xff] %vm26, %v750
  %767 = vst.msk [vmem:[#allocation2 + $0x48] sm:$0xff] %vm26, %v751
  %768 = vst.msk [vmem:[#allocation2 + $0x50] sm:$0xff] %vm26, %v752
  %769 = vst.msk [vmem:[#allocation2 + $0x58] sm:$0xff] %vm26, %v753
  %770 = vst.msk [vmem:[#allocation2 + $0x60] sm:$0xff] %vm26, %v754
  %771 = vst.msk [vmem:[#allocation2 + $0x68] sm:$0xff] %vm26, %v755
  %772 = vst.msk [vmem:[#allocation2 + $0x70] sm:$0xff] %vm26, %v756
  %773 = vst.msk [vmem:[#allocation2 + $0x78] sm:$0xff] %vm26, %v757
  %774 = vst.msk [vmem:[#allocation2 + $0x80] sm:$0xff] %vm26, %v758
  %775 = vst.msk [vmem:[#allocation2 + $0x88] sm:$0xff] %vm26, %v759
  %v776 = vld [vmem:[#allocation2] sm:$0xff]
  %v777 = vld [vmem:[#allocation2 + $0x8] sm:$0xff]
  %v778 = vld [vmem:[#allocation2 + $0x10] sm:$0xff]
  %v779 = vld [vmem:[#allocation2 + $0x18] sm:$0xff]
  %v780 = vld [vmem:[#allocation2 + $0x20] sm:$0xff]
  %v781 = vld [vmem:[#allocation2 + $0x28] sm:$0xff]
  %v782 = vld [vmem:[#allocation2 + $0x30] sm:$0xff]
  %v783 = vld [vmem:[#allocation2 + $0x38] sm:$0xff]
  %v784 = vld [vmem:[#allocation2 + $0x40] sm:$0xff]
  %v785 = vld [vmem:[#allocation2 + $0x48] sm:$0xff]
  %v786 = vld [vmem:[#allocation2 + $0x50] sm:$0xff]
  %v787 = vld [vmem:[#allocation2 + $0x58] sm:$0xff]
  %v788 = vld [vmem:[#allocation2 + $0x60] sm:$0xff]
  %v789 = vld [vmem:[#allocation2 + $0x68] sm:$0xff]
  %v790 = vld [vmem:[#allocation2 + $0x70] sm:$0xff]
  %v791 = vld [vmem:[#allocation2 + $0x78] sm:$0xff]
  %v792 = vld [vmem:[#allocation2 + $0x80] sm:$0xff]
  %v793 = vld [vmem:[#allocation2 + $0x88] sm:$0xff]
  %v794 = vld [vmem:[#allocation2 + $0x90] sm:$0xff]
  %v795 = vld [vmem:[#allocation2 + $0x98] sm:$0xff]
  %v796 = vmax.f32 %v776, 0.0
  %v797 = vmax.f32 %v777, 0.0
  %v798 = vmax.f32 %v778, 0.0
  %v799 = vmax.f32 %v779, 0.0
  %v800 = vmax.f32 %v780, 0.0
  %v801 = vmax.f32 %v781, 0.0
  %v802 = vmax.f32 %v782, 0.0
  %v803 = vmax.f32 %v783, 0.0
  %v804 = vmax.f32 %v784, 0.0
  %v805 = vmax.f32 %v785, 0.0
  %v806 = vmax.f32 %v786, 0.0
  %v807 = vmax.f32 %v787, 0.0
  %v808 = vmax.f32 %v788, 0.0
  %v809 = vmax.f32 %v789, 0.0
  %v810 = vmax.f32 %v790, 0.0
  %v811 = vmax.f32 %v791, 0.0
  %v812 = vmax.f32 %v792, 0.0
  %v813 = vmax.f32 %v793, 0.0
  %v814 = vmax.f32 %v794, 0.0
  %v815 = vmax.f32 %v795, 0.0
  %832 = vrot.lane.b32.xlu0 %v797, 32
  %v833 = vpop.permute.xlu0 %832
  %834 = vrot.lane.b32.xlu0 %v798, 32
  %v835 = vpop.permute.xlu0 %834
  %836 = vrot.lane.b32.xlu0 %v799, 32
  %v837 = vpop.permute.xlu0 %836
  %838 = vrot.lane.b32.xlu0 %v800, 32
  %v839 = vpop.permute.xlu0 %838
  %840 = vrot.lane.b32.xlu0 %v801, 32
  %v841 = vpop.permute.xlu0 %840
  %842 = vrot.lane.b32.xlu0 %v802, 32
  %v843 = vpop.permute.xlu0 %842
  %844 = vrot.lane.b32.xlu0 %v803, 32
  %v845 = vpop.permute.xlu0 %844
  %846 = vrot.lane.b32.xlu0 %v804, 32
  %v847 = vpop.permute.xlu0 %846
  %848 = vrot.lane.b32.xlu0 %v805, 32
  %v849 = vpop.permute.xlu0 %848
  %850 = vrot.lane.b32.xlu0 %v806, 32
  %v851 = vpop.permute.xlu0 %850
  %852 = vrot.lane.b32.xlu0 %v807, 32
  %v853 = vpop.permute.xlu0 %852
  %854 = vrot.lane.b32.xlu0 %v808, 32
  %v855 = vpop.permute.xlu0 %854
  %856 = vrot.lane.b32.xlu0 %v809, 32
  %v857 = vpop.permute.xlu0 %856
  %858 = vrot.lane.b32.xlu0 %v810, 32
  %v859 = vpop.permute.xlu0 %858
  %860 = vrot.lane.b32.xlu0 %v811, 32
  %v861 = vpop.permute.xlu0 %860
  %862 = vrot.lane.b32.xlu0 %v812, 32
  %v863 = vpop.permute.xlu0 %862
  %881 = vrot.lane.b32.xlu0 %v798, 64
  %v882 = vpop.permute.xlu0 %881
  %883 = vrot.lane.b32.xlu0 %v799, 64
  %v884 = vpop.permute.xlu0 %883
  %885 = vrot.lane.b32.xlu0 %v800, 64
  %v886 = vpop.permute.xlu0 %885
  %887 = vrot.lane.b32.xlu0 %v801, 64
  %v888 = vpop.permute.xlu0 %887
  %889 = vrot.lane.b32.xlu0 %v802, 64
  %v890 = vpop.permute.xlu0 %889
  %891 = vrot.lane.b32.xlu0 %v803, 64
  %v892 = vpop.permute.xlu0 %891
  %893 = vrot.lane.b32.xlu0 %v804, 64
  %v894 = vpop.permute.xlu0 %893
  %895 = vrot.lane.b32.xlu0 %v805, 64
  %v896 = vpop.permute.xlu0 %895
  %897 = vrot.lane.b32.xlu0 %v806, 64
  %v898 = vpop.permute.xlu0 %897
  %899 = vrot.lane.b32.xlu0 %v807, 64
  %v900 = vpop.permute.xlu0 %899
  %901 = vrot.lane.b32.xlu0 %v808, 64
  %v902 = vpop.permute.xlu0 %901
  %903 = vrot.lane.b32.xlu0 %v809, 64
  %v904 = vpop.permute.xlu0 %903
  %905 = vrot.lane.b32.xlu0 %v810, 64
  %v906 = vpop.permute.xlu0 %905
  %907 = vrot.lane.b32.xlu0 %v811, 64
  %v908 = vpop.permute.xlu0 %907
  %909 = vrot.lane.b32.xlu0 %v812, 64
  %v910 = vpop.permute.xlu0 %909
  %911 = vrot.lane.b32.xlu0 %v813, 64
  %v912 = vpop.permute.xlu0 %911
  %930 = vrot.lane.b32.xlu0 %v799, 96
  %v931 = vpop.permute.xlu0 %930
  %932 = vrot.lane.b32.xlu0 %v800, 96
  %v933 = vpop.permute.xlu0 %932
  %934 = vrot.lane.b32.xlu0 %v801, 96
  %v935 = vpop.permute.xlu0 %934
  %936 = vrot.lane.b32.xlu0 %v802, 96
  %v937 = vpop.permute.xlu0 %936
  %938 = vrot.lane.b32.xlu0 %v803, 96
  %v939 = vpop.permute.xlu0 %938
  %940 = vrot.lane.b32.xlu0 %v804, 96
  %v941 = vpop.permute.xlu0 %940
  %942 = vrot.lane.b32.xlu0 %v805, 96
  %v943 = vpop.permute.xlu0 %942
  %944 = vrot.lane.b32.xlu0 %v806, 96
  %v945 = vpop.permute.xlu0 %944
  %946 = vrot.lane.b32.xlu0 %v807, 96
  %v947 = vpop.permute.xlu0 %946
  %948 = vrot.lane.b32.xlu0 %v808, 96
  %v949 = vpop.permute.xlu0 %948
  %950 = vrot.lane.b32.xlu0 %v809, 96
  %v951 = vpop.permute.xlu0 %950
  %952 = vrot.lane.b32.xlu0 %v810, 96
  %v953 = vpop.permute.xlu0 %952
  %954 = vrot.lane.b32.xlu0 %v811, 96
  %v955 = vpop.permute.xlu0 %954
  %956 = vrot.lane.b32.xlu0 %v812, 96
  %v957 = vpop.permute.xlu0 %956
  %958 = vrot.lane.b32.xlu0 %v813, 96
  %v959 = vpop.permute.xlu0 %958
  %960 = vrot.lane.b32.xlu0 %v814, 96
  %v961 = vpop.permute.xlu0 %960
  %v978 = vsel %vm26, %v796, %v833
  %v979 = vsel %vm26, %v797, %v835
  %v980 = vsel %vm26, %v798, %v837
  %v981 = vsel %vm26, %v799, %v839
  %v982 = vsel %vm26, %v800, %v841
  %v983 = vsel %vm26, %v801, %v843
  %v984 = vsel %vm26, %v802, %v845
  %v985 = vsel %vm26, %v803, %v847
  %v986 = vsel %vm26, %v804, %v849
  %v987 = vsel %vm26, %v805, %v851
  %v988 = vsel %vm26, %v806, %v853
  %v989 = vsel %vm26, %v807, %v855
  %v990 = vsel %vm26, %v808, %v857
  %v991 = vsel %vm26, %v809, %v859
  %v992 = vsel %vm26, %v810, %v861
  %v993 = vsel %vm26, %v811, %v863
  %v994 = vsel %vm489, %v978, %v882
  %v995 = vsel %vm489, %v979, %v884
  %v996 = vsel %vm489, %v980, %v886
  %v997 = vsel %vm489, %v981, %v888
  %v998 = vsel %vm489, %v982, %v890
  %v999 = vsel %vm489, %v983, %v892
  %v1000 = vsel %vm489, %v984, %v894
  %v1001 = vsel %vm489, %v985, %v896
  %v1002 = vsel %vm489, %v986, %v898
  %v1003 = vsel %vm489, %v987, %v900
  %v1004 = vsel %vm489, %v988, %v902
  %v1005 = vsel %vm489, %v989, %v904
  %v1006 = vsel %vm489, %v990, %v906
  %v1007 = vsel %vm489, %v991, %v908
  %v1008 = vsel %vm489, %v992, %v910
  %v1009 = vsel %vm489, %v993, %v912
  %v1010 = vsel %vm506, %v994, %v931
  %v1011 = vsel %vm506, %v995, %v933
  %v1012 = vsel %vm506, %v996, %v935
  %v1013 = vsel %vm506, %v997, %v937
  %v1014 = vsel %vm506, %v998, %v939
  %v1015 = vsel %vm506, %v999, %v941
  %v1016 = vsel %vm506, %v1000, %v943
  %v1017 = vsel %vm506, %v1001, %v945
  %v1018 = vsel %vm506, %v1002, %v947
  %v1019 = vsel %vm506, %v1003, %v949
  %v1020 = vsel %vm506, %v1004, %v951
  %v1021 = vsel %vm506, %v1005, %v953
  %v1022 = vsel %vm506, %v1006, %v955
  %v1023 = vsel %vm506, %v1007, %v957
  %v1024 = vsel %vm506, %v1008, %v959
  %v1025 = vsel %vm506, %v1009, %v961
  %s1026 = scalar_lea.vmem %s3, 160
  %v1027 = vld [vmem:[%s1026] sm:$0xff]
  %v1028 = vld [vmem:[%s1026 + $0x8] sm:$0xff]
  %v1029 = vld [vmem:[%s1026 + $0x10] sm:$0xff]
  %v1030 = vld [vmem:[%s1026 + $0x18] sm:$0xff]
  %v1031 = vld [vmem:[%s1026 + $0x20] sm:$0xff]
  %v1032 = vld [vmem:[%s1026 + $0x28] sm:$0xff]
  %v1033 = vld [vmem:[%s1026 + $0x30] sm:$0xff]
  %v1034 = vld [vmem:[%s1026 + $0x38] sm:$0xff]
  %v1035 = vld [vmem:[%s1026 + $0x40] sm:$0xff]
  %v1036 = vld [vmem:[%s1026 + $0x48] sm:$0xff]
  %v1037 = vld [vmem:[%s1026 + $0x50] sm:$0xff]
  %v1038 = vld [vmem:[%s1026 + $0x58] sm:$0xff]
  %v1039 = vld [vmem:[%s1026 + $0x60] sm:$0xff]
  %v1040 = vld [vmem:[%s1026 + $0x68] sm:$0xff]
  %v1041 = vld [vmem:[%s1026 + $0x70] sm:$0xff]
  %v1042 = vld [vmem:[%s1026 + $0x78] sm:$0xff]
  %v1043 = vld [vmem:[%s1026 + $0x80] sm:$0xff]
  %v1044 = vld [vmem:[%s1026 + $0x88] sm:$0xff]
  %v1045 = vld [vmem:[%s1026 + $0x90] sm:$0xff]
  %v1046 = vld [vmem:[%s1026 + $0x98] sm:$0xff]
  %s1047 = scalar_lea.vmem %s4, 1
  %v1048 = vld [vmem:[%s1047] sm:$0x1]
  %v1050 = vlaneseq
  %v1051 = vshrl.u32 %v1050, 7
  %v1052 = vsub.s32 0, %v1051
  %v1053 = vrot.slane %v1048, %v1052
  %v1055 = vsel %vm26, %v800, 0
  %v1057 = vsel %vm26, %v801, 0
  %v1059 = vsel %vm26, %v802, 0
  %v1061 = vsel %vm26, %v803, 0
  %v1063 = vsel %vm26, %v804, 0
  %v1065 = vsel %vm26, %v805, 0
  %v1067 = vsel %vm26, %v806, 0
  %v1069 = vsel %vm26, %v807, 0
  %v1071 = vsel %vm26, %v808, 0
  %v1073 = vsel %vm26, %v809, 0
  %v1075 = vsel %vm26, %v810, 0
  %v1077 = vsel %vm26, %v811, 0
  %v1079 = vsel %vm26, %v812, 0
  %v1081 = vsel %vm26, %v813, 0
  %v1083 = vsel %vm26, %v814, 0
  %v1086 = vsel %vm26, %v815, 0
  %1088 = vmatprep.subr.mxu0 0.0
  %1089 = vmatpush1.msra.mxu0 %v1042
  %1090 = vmatprep.subr.mxu0 0.0
  %1091 = vmatpush1.msra.mxu0 %v1041
  %1092 = vmatprep.subr.mxu0 0.0
  %1093 = vmatpush1.msra.mxu0 %v1040
  %1094 = vmatprep.subr.mxu0 0.0
  %1095 = vmatpush1.msra.mxu0 %v1039
  %1096 = vmatprep.subr.mxu0 0.0
  %1097 = vmatpush1.msra.mxu0 %v1038
  %1098 = vmatprep.subr.mxu0 0.0
  %1099 = vmatpush1.msra.mxu0 %v1037
  %1100 = vmatprep.subr.mxu0 0.0
  %1101 = vmatpush1.msra.mxu0 %v1036
  %1102 = vmatprep.subr.mxu0 0.0
  %1103 = vmatpush1.msra.mxu0 %v1035
  %1104 = vmatprep.subr.mxu0 0.0
  %1105 = vmatpush1.msra.mxu0 %v1034
  %1106 = vmatprep.subr.mxu0 0.0
  %1107 = vmatpush1.msra.mxu0 %v1033
  %1108 = vmatprep.subr.mxu0 0.0
  %1109 = vmatpush1.msra.mxu0 %v1032
  %1110 = vmatprep.subr.mxu0 0.0
  %1111 = vmatpush1.msra.mxu0 %v1031
  %1112 = vmatprep.subr.mxu0 0.0
  %1113 = vmatpush1.msra.mxu0 %v1030
  %1114 = vmatprep.subr.mxu0 0.0
  %1115 = vmatpush1.msra.mxu0 %v1029
  %1116 = vmatprep.subr.mxu0 0.0
  %1117 = vmatpush1.msra.mxu0 %v1028
  %1118 = vmatprep.subr.mxu0 0.0
  %1119 = vmatpush1.msra.mxu0 %v1027
  %1120 = vmatprep.subr.mxu0 0.0
  %1121 = vmatpush2.msra.mxu0 0.0
  %1122 = vmatprep.subr.mxu0 0.0
  %1123 = vmatpush2.msra.mxu0 0.0
  %1124 = vmatprep.subr.mxu0 0.0
  %1125 = vmatpush2.msra.mxu0 0.0
  %1126 = vmatprep.subr.mxu0 0.0
  %1127 = vmatpush2.msra.mxu0 0.0
  %1128 = vmatprep.subr.mxu0 0.0
  %1129 = vmatpush2.msra.mxu0 0.0
  %1130 = vmatprep.subr.mxu0 0.0
  %1131 = vmatpush2.msra.mxu0 0.0
  %1132 = vmatprep.subr.mxu0 0.0
  %1133 = vmatpush2.msra.mxu0 0.0
  %1134 = vmatprep.subr.mxu0 0.0
  %1135 = vmatpush2.msra.mxu0 0.0
  %1136 = vmatprep.subr.mxu0 0.0
  %1137 = vmatpush2.msra.mxu0 0.0
  %1138 = vmatprep.subr.mxu0 0.0
  %1139 = vmatpush2.msra.mxu0 0.0
  %1140 = vmatprep.subr.mxu0 0.0
  %1141 = vmatpush2.msra.mxu0 0.0
  %1142 = vmatprep.subr.mxu0 0.0
  %1143 = vmatpush2.msra.mxu0 0.0
  %1144 = vmatprep.subr.mxu0 0.0
  %1145 = vmatpush2.msra.mxu0 %v1046
  %1146 = vmatprep.subr.mxu0 0.0
  %1147 = vmatpush2.msra.mxu0 %v1045
  %1148 = vmatprep.subr.mxu0 0.0
  %1149 = vmatpush2.msra.mxu0 %v1044
  %1150 = vmatprep.subr.mxu0 0.0
  %1151 = vmatpush2.msra.mxu0 %v1043
  %1152 = vmatprep.mubr.f32.mxu0 %v1055
  %1153 = vmatmul.mubr.f32.gmra.mxu0 %v1010
  %v1154 = vpop.f32.mrf.mxu0
  %v1155 = vadd.f32 %v1053, %v1154
  %v1156 = vpop.f32.mrf.mxu0
  %1157 = vmatprep.mubr.f32.mxu0 %v1057
  %1158 = vmatmul.mubr.f32.gmra.mxu0 %v1011
  %v1159 = vpop.f32.mrf.mxu0
  %v1160 = vadd.f32 %v1053, %v1159
  %v1161 = vpop.f32.mrf.mxu0
  %1162 = vmatprep.mubr.f32.mxu0 %v1059
  %1163 = vmatmul.mubr.f32.gmra.mxu0 %v1012
  %v1164 = vpop.f32.mrf.mxu0
  %v1165 = vadd.f32 %v1053, %v1164
  %v1166 = vpop.f32.mrf.mxu0
  %1167 = vmatprep.mubr.f32.mxu0 %v1061
  %1168 = vmatmul.mubr.f32.gmra.mxu0 %v1013
  %v1169 = vpop.f32.mrf.mxu0
  %v1170 = vadd.f32 %v1053, %v1169
  %v1171 = vpop.f32.mrf.mxu0
  %1172 = vmatprep.mubr.f32.mxu0 %v1063
  %1173 = vmatmul.mubr.f32.gmra.mxu0 %v1014
  %v1174 = vpop.f32.mrf.mxu0
  %v1175 = vadd.f32 %v1053, %v1174
  %v1176 = vpop.f32.mrf.mxu0
  %1177 = vmatprep.mubr.f32.mxu0 %v1065
  %1178 = vmatmul.mubr.f32.gmra.mxu0 %v1015
  %v1179 = vpop.f32.mrf.mxu0
  %v1180 = vadd.f32 %v1053, %v1179
  %v1181 = vpop.f32.mrf.mxu0
  %1182 = vmatprep.mubr.f32.mxu0 %v1067
  %1183 = vmatmul.mubr.f32.gmra.mxu0 %v1016
  %v1184 = vpop.f32.mrf.mxu0
  %v1185 = vadd.f32 %v1053, %v1184
  %v1186 = vpop.f32.mrf.mxu0
  %1187 = vmatprep.mubr.f32.mxu0 %v1069
  %1188 = vmatmul.mubr.f32.gmra.mxu0 %v1017
  %v1189 = vpop.f32.mrf.mxu0
  %v1190 = vadd.f32 %v1053, %v1189
  %v1191 = vpop.f32.mrf.mxu0
  %1192 = vmatprep.mubr.f32.mxu0 %v1071
  %1193 = vmatmul.mubr.f32.gmra.mxu0 %v1018
  %v1194 = vpop.f32.mrf.mxu0
  %v1195 = vadd.f32 %v1053, %v1194
  %v1196 = vpop.f32.mrf.mxu0
  %1197 = vmatprep.mubr.f32.mxu0 %v1073
  %1198 = vmatmul.mubr.f32.gmra.mxu0 %v1019
  %v1199 = vpop.f32.mrf.mxu0
  %v1200 = vadd.f32 %v1053, %v1199
  %v1201 = vpop.f32.mrf.mxu0
  %1202 = vmatprep.mubr.f32.mxu0 %v1075
  %1203 = vmatmul.mubr.f32.gmra.mxu0 %v1020
  %v1204 = vpop.f32.mrf.mxu0
  %v1205 = vadd.f32 %v1053, %v1204
  %v1206 = vpop.f32.mrf.mxu0
  %1207 = vmatprep.mubr.f32.mxu0 %v1077
  %1208 = vmatmul.mubr.f32.gmra.mxu0 %v1021
  %v1209 = vpop.f32.mrf.mxu0
  %v1210 = vadd.f32 %v1053, %v1209
  %v1211 = vpop.f32.mrf.mxu0
  %1212 = vmatprep.mubr.f32.mxu0 %v1079
  %1213 = vmatmul.mubr.f32.gmra.mxu0 %v1022
  %v1214 = vpop.f32.mrf.mxu0
  %v1215 = vadd.f32 %v1053, %v1214
  %v1216 = vpop.f32.mrf.mxu0
  %1217 = vmatprep.mubr.f32.mxu0 %v1081
  %1218 = vmatmul.mubr.f32.gmra.mxu0 %v1023
  %v1219 = vpop.f32.mrf.mxu0
  %v1220 = vadd.f32 %v1053, %v1219
  %v1221 = vpop.f32.mrf.mxu0
  %1222 = vmatprep.mubr.f32.mxu0 %v1083
  %1223 = vmatmul.mubr.f32.gmra.mxu0 %v1024
  %v1224 = vpop.f32.mrf.mxu0
  %v1225 = vadd.f32 %v1053, %v1224
  %v1226 = vpop.f32.mrf.mxu0
  %1227 = vmatprep.mubr.f32.mxu0 %v1086
  %1228 = vmatmul.mubr.f32.gmra.mxu0 %v1025
  %v1229 = vpop.f32.mrf.mxu0
  %v1230 = vadd.f32 %v1053, %v1229
  %v1231 = vpop.f32.mrf.mxu0
  %1232 = vdwg.mxu0
  %v1233 = vmul.f32 %v1155, 0.3
  %v1234 = vmul.f32 %v1160, 0.3
  %v1235 = vmul.f32 %v1165, 0.3
  %v1236 = vmul.f32 %v1170, 0.3
  %v1237 = vmul.f32 %v1175, 0.3
  %v1238 = vmul.f32 %v1180, 0.3
  %v1239 = vmul.f32 %v1185, 0.3
  %v1240 = vmul.f32 %v1190, 0.3
  %v1241 = vmul.f32 %v1195, 0.3
  %v1242 = vmul.f32 %v1200, 0.3
  %v1243 = vmul.f32 %v1205, 0.3
  %v1244 = vmul.f32 %v1210, 0.3
  %v1245 = vmul.f32 %v1215, 0.3
  %v1246 = vmul.f32 %v1220, 0.3
  %v1247 = vmul.f32 %v1225, 0.3
  %v1248 = vmul.f32 %v1230, 0.3
  %v1249 = vadd.f32 %v778, %v1233
  %v1250 = vadd.f32 %v779, %v1234
  %v1251 = vadd.f32 %v780, %v1235
  %v1252 = vadd.f32 %v781, %v1236
  %v1253 = vadd.f32 %v782, %v1237
  %v1254 = vadd.f32 %v783, %v1238
  %v1255 = vadd.f32 %v784, %v1239
  %v1256 = vadd.f32 %v785, %v1240
  %v1257 = vadd.f32 %v786, %v1241
  %v1258 = vadd.f32 %v787, %v1242
  %v1259 = vadd.f32 %v788, %v1243
  %v1260 = vadd.f32 %v789, %v1244
  %v1261 = vadd.f32 %v790, %v1245
  %v1262 = vadd.f32 %v791, %v1246
  %v1263 = vadd.f32 %v792, %v1247
  %v1264 = vadd.f32 %v793, %v1248
  %1265 = vst.msk [vmem:[#allocation2 + $0x10] sm:$0xff] %vm26, %v1249
  %1266 = vst.msk [vmem:[#allocation2 + $0x18] sm:$0xff] %vm26, %v1250
  %1267 = vst.msk [vmem:[#allocation2 + $0x20] sm:$0xff] %vm26, %v1251
  %1268 = vst.msk [vmem:[#allocation2 + $0x28] sm:$0xff] %vm26, %v1252
  %1269 = vst.msk [vmem:[#allocation2 + $0x30] sm:$0xff] %vm26, %v1253
  %1270 = vst.msk [vmem:[#allocation2 + $0x38] sm:$0xff] %vm26, %v1254
  %1271 = vst.msk [vmem:[#allocation2 + $0x40] sm:$0xff] %vm26, %v1255
  %1272 = vst.msk [vmem:[#allocation2 + $0x48] sm:$0xff] %vm26, %v1256
  %1273 = vst.msk [vmem:[#allocation2 + $0x50] sm:$0xff] %vm26, %v1257
  %1274 = vst.msk [vmem:[#allocation2 + $0x58] sm:$0xff] %vm26, %v1258
  %1275 = vst.msk [vmem:[#allocation2 + $0x60] sm:$0xff] %vm26, %v1259
  %1276 = vst.msk [vmem:[#allocation2 + $0x68] sm:$0xff] %vm26, %v1260
  %1277 = vst.msk [vmem:[#allocation2 + $0x70] sm:$0xff] %vm26, %v1261
  %1278 = vst.msk [vmem:[#allocation2 + $0x78] sm:$0xff] %vm26, %v1262
  %1279 = vst.msk [vmem:[#allocation2 + $0x80] sm:$0xff] %vm26, %v1263
  %1280 = vst.msk [vmem:[#allocation2 + $0x88] sm:$0xff] %vm26, %v1264
  %v1281 = vld [vmem:[#allocation2 + $0x10] sm:$0xff]
  %v1282 = vld [vmem:[#allocation2 + $0x18] sm:$0xff]
  %v1283 = vld [vmem:[#allocation2 + $0x20] sm:$0xff]
  %v1284 = vld [vmem:[#allocation2 + $0x28] sm:$0xff]
  %v1285 = vld [vmem:[#allocation2 + $0x30] sm:$0xff]
  %v1286 = vld [vmem:[#allocation2 + $0x38] sm:$0xff]
  %v1287 = vld [vmem:[#allocation2 + $0x40] sm:$0xff]
  %v1288 = vld [vmem:[#allocation2 + $0x48] sm:$0xff]
  %v1289 = vld [vmem:[#allocation2 + $0x50] sm:$0xff]
  %v1290 = vld [vmem:[#allocation2 + $0x58] sm:$0xff]
  %v1291 = vld [vmem:[#allocation2 + $0x60] sm:$0xff]
  %v1292 = vld [vmem:[#allocation2 + $0x68] sm:$0xff]
  %v1293 = vld [vmem:[#allocation2 + $0x70] sm:$0xff]
  %v1294 = vld [vmem:[#allocation2 + $0x78] sm:$0xff]
  %v1295 = vld [vmem:[#allocation2 + $0x80] sm:$0xff]
  %v1296 = vld [vmem:[#allocation2 + $0x88] sm:$0xff]
  %v1297 = vld [vmem:[%s5] sm:$0xff]
  %v1298 = vld [vmem:[%s5 + $0x8] sm:$0xff]
  %v1299 = vld [vmem:[%s5 + $0x10] sm:$0xff]
  %v1300 = vld [vmem:[%s5 + $0x18] sm:$0xff]
  %v1301 = vld [vmem:[%s6] sm:$0x1]
  %v1303 = vlaneseq
  %v1304 = vshrl.u32 %v1303, 7
  %v1305 = vsub.s32 0, %v1304
  %v1306 = vrot.slane %v1301, %v1305
  %v1309 = vsel %vm26, %v1281, 0
  %v1312 = vsel %vm26, %v1282, 0
  %v1315 = vsel %vm26, %v1283, 0
  %v1318 = vsel %vm26, %v1284, 0
  %v1321 = vsel %vm26, %v1285, 0
  %v1324 = vsel %vm26, %v1286, 0
  %v1327 = vsel %vm26, %v1287, 0
  %v1330 = vsel %vm26, %v1288, 0
  %v1333 = vsel %vm26, %v1289, 0
  %v1336 = vsel %vm26, %v1290, 0
  %v1339 = vsel %vm26, %v1291, 0
  %v1342 = vsel %vm26, %v1292, 0
  %v1345 = vsel %vm26, %v1293, 0
  %v1348 = vsel %vm26, %v1294, 0
  %v1351 = vsel %vm26, %v1295, 0
  %v1354 = vsel %vm26, %v1296, 0
  %1356 = vmatprep.subr.mxu0 0.0
  %1357 = vmatpush1.msra.mxu0 0.0
  %1358 = vmatprep.subr.mxu0 0.0
  %1359 = vmatpush1.msra.mxu0 0.0
  %1360 = vmatprep.subr.mxu0 0.0
  %1361 = vmatpush1.msra.mxu0 0.0
  %1362 = vmatprep.subr.mxu0 0.0
  %1363 = vmatpush1.msra.mxu0 0.0
  %1364 = vmatprep.subr.mxu0 0.0
  %1365 = vmatpush1.msra.mxu0 0.0
  %1366 = vmatprep.subr.mxu0 0.0
  %1367 = vmatpush1.msra.mxu0 0.0
  %1368 = vmatprep.subr.mxu0 0.0
  %1369 = vmatpush1.msra.mxu0 0.0
  %1370 = vmatprep.subr.mxu0 0.0
  %1371 = vmatpush1.msra.mxu0 0.0
  %1372 = vmatprep.subr.mxu0 0.0
  %1373 = vmatpush1.msra.mxu0 0.0
  %1374 = vmatprep.subr.mxu0 0.0
  %1375 = vmatpush1.msra.mxu0 0.0
  %1376 = vmatprep.subr.mxu0 0.0
  %1377 = vmatpush1.msra.mxu0 0.0
  %1378 = vmatprep.subr.mxu0 0.0
  %1379 = vmatpush1.msra.mxu0 0.0
  %1380 = vmatprep.subr.mxu0 0.0
  %1381 = vmatpush1.msra.mxu0 %v1300
  %1382 = vmatprep.subr.mxu0 0.0
  %1383 = vmatpush1.msra.mxu0 %v1299
  %1384 = vmatprep.subr.mxu0 0.0
  %1385 = vmatpush1.msra.mxu0 %v1298
  %1386 = vmatprep.subr.mxu0 0.0
  %1387 = vmatpush1.msra.mxu0 %v1297
  %1388 = vmatprep.subr.mxu0 0.0
  %1389 = vmatpush2.msra.mxu0 0.0
  %1390 = vmatprep.subr.mxu0 0.0
  %1391 = vmatpush2.msra.mxu0 0.0
  %1392 = vmatprep.subr.mxu0 0.0
  %1393 = vmatpush2.msra.mxu0 0.0
  %1394 = vmatprep.subr.mxu0 0.0
  %1395 = vmatpush2.msra.mxu0 0.0
  %1396 = vmatprep.subr.mxu0 0.0
  %1397 = vmatpush2.msra.mxu0 0.0
  %1398 = vmatprep.subr.mxu0 0.0
  %1399 = vmatpush2.msra.mxu0 0.0
  %1400 = vmatprep.subr.mxu0 0.0
  %1401 = vmatpush2.msra.mxu0 0.0
  %1402 = vmatprep.subr.mxu0 0.0
  %1403 = vmatpush2.msra.mxu0 0.0
  %1404 = vmatprep.subr.mxu0 0.0
  %1405 = vmatpush2.msra.mxu0 0.0
  %1406 = vmatprep.subr.mxu0 0.0
  %1407 = vmatpush2.msra.mxu0 0.0
  %1408 = vmatprep.subr.mxu0 0.0
  %1409 = vmatpush2.msra.mxu0 0.0
  %1410 = vmatprep.subr.mxu0 0.0
  %1411 = vmatpush2.msra.mxu0 0.0
  %1412 = vmatprep.subr.mxu0 0.0
  %1413 = vmatpush2.msra.mxu0 0.0
  %1414 = vmatprep.subr.mxu0 0.0
  %1415 = vmatpush2.msra.mxu0 0.0
  %1416 = vmatprep.subr.mxu0 0.0
  %1417 = vmatpush2.msra.mxu0 0.0
  %1418 = vmatprep.subr.mxu0 0.0
  %1419 = vmatpush2.msra.mxu0 0.0
  %1420 = vmatprep.mubr.f32.mxu0 0.0
  %1421 = vmatmul.mubr.f32.gmra.mxu0 %v1309
  %v1422 = vpop.f32.mrf.mxu0
  %v1423 = vadd.f32 %v1306, %v1422
  %v1424 = vpop.f32.mrf.mxu0
  %1425 = vmatprep.mubr.f32.mxu0 0.0
  %1426 = vmatmul.mubr.f32.gmra.mxu0 %v1312
  %v1427 = vpop.f32.mrf.mxu0
  %v1428 = vadd.f32 %v1306, %v1427
  %v1429 = vpop.f32.mrf.mxu0
  %1430 = vmatprep.mubr.f32.mxu0 0.0
  %1431 = vmatmul.mubr.f32.gmra.mxu0 %v1315
  %v1432 = vpop.f32.mrf.mxu0
  %v1433 = vadd.f32 %v1306, %v1432
  %v1434 = vpop.f32.mrf.mxu0
  %1435 = vmatprep.mubr.f32.mxu0 0.0
  %1436 = vmatmul.mubr.f32.gmra.mxu0 %v1318
  %v1437 = vpop.f32.mrf.mxu0
  %v1438 = vadd.f32 %v1306, %v1437
  %v1439 = vpop.f32.mrf.mxu0
  %1440 = vmatprep.mubr.f32.mxu0 0.0
  %1441 = vmatmul.mubr.f32.gmra.mxu0 %v1321
  %v1442 = vpop.f32.mrf.mxu0
  %v1443 = vadd.f32 %v1306, %v1442
  %v1444 = vpop.f32.mrf.mxu0
  %1445 = vmatprep.mubr.f32.mxu0 0.0
  %1446 = vmatmul.mubr.f32.gmra.mxu0 %v1324
  %v1447 = vpop.f32.mrf.mxu0
  %v1448 = vadd.f32 %v1306, %v1447
  %v1449 = vpop.f32.mrf.mxu0
  %1450 = vmatprep.mubr.f32.mxu0 0.0
  %1451 = vmatmul.mubr.f32.gmra.mxu0 %v1327
  %v1452 = vpop.f32.mrf.mxu0
  %v1453 = vadd.f32 %v1306, %v1452
  %v1454 = vpop.f32.mrf.mxu0
  %1455 = vmatprep.mubr.f32.mxu0 0.0
  %1456 = vmatmul.mubr.f32.gmra.mxu0 %v1330
  %v1457 = vpop.f32.mrf.mxu0
  %v1458 = vadd.f32 %v1306, %v1457
  %v1459 = vpop.f32.mrf.mxu0
  %1460 = vmatprep.mubr.f32.mxu0 0.0
  %1461 = vmatmul.mubr.f32.gmra.mxu0 %v1333
  %v1462 = vpop.f32.mrf.mxu0
  %v1463 = vadd.f32 %v1306, %v1462
  %v1464 = vpop.f32.mrf.mxu0
  %1465 = vmatprep.mubr.f32.mxu0 0.0
  %1466 = vmatmul.mubr.f32.gmra.mxu0 %v1336
  %v1467 = vpop.f32.mrf.mxu0
  %v1468 = vadd.f32 %v1306, %v1467
  %v1469 = vpop.f32.mrf.mxu0
  %1470 = vmatprep.mubr.f32.mxu0 0.0
  %1471 = vmatmul.mubr.f32.gmra.mxu0 %v1339
  %v1472 = vpop.f32.mrf.mxu0
  %v1473 = vadd.f32 %v1306, %v1472
  %v1474 = vpop.f32.mrf.mxu0
  %1475 = vmatprep.mubr.f32.mxu0 0.0
  %1476 = vmatmul.mubr.f32.gmra.mxu0 %v1342
  %v1477 = vpop.f32.mrf.mxu0
  %v1478 = vadd.f32 %v1306, %v1477
  %v1479 = vpop.f32.mrf.mxu0
  %1480 = vmatprep.mubr.f32.mxu0 0.0
  %1481 = vmatmul.mubr.f32.gmra.mxu0 %v1345
  %v1482 = vpop.f32.mrf.mxu0
  %v1483 = vadd.f32 %v1306, %v1482
  %v1484 = vpop.f32.mrf.mxu0
  %1485 = vmatprep.mubr.f32.mxu0 0.0
  %1486 = vmatmul.mubr.f32.gmra.mxu0 %v1348
  %v1487 = vpop.f32.mrf.mxu0
  %v1488 = vadd.f32 %v1306, %v1487
  %v1489 = vpop.f32.mrf.mxu0
  %1490 = vmatprep.mubr.f32.mxu0 0.0
  %1491 = vmatmul.mubr.f32.gmra.mxu0 %v1351
  %v1492 = vpop.f32.mrf.mxu0
  %v1493 = vadd.f32 %v1306, %v1492
  %v1494 = vpop.f32.mrf.mxu0
  %1495 = vmatprep.mubr.f32.mxu0 0.0
  %1496 = vmatmul.mubr.f32.gmra.mxu0 %v1354
  %v1497 = vpop.f32.mrf.mxu0
  %v1498 = vadd.f32 %v1306, %v1497
  %v1499 = vpop.f32.mrf.mxu0
  %1500 = vdwg.mxu0
  %vm1501 = vcmask 64512
  %v1502 = vsel %vm1501, %v1423, -inf
  %1503 = vmax.xlane.f32.xlu0 %v1502
  %v1504 = vpop.xlane.xlu0 %1503
  %v1505 = vsel %vm1501, %v1428, -inf
  %1506 = vmax.xlane.f32.xlu0 %v1505
  %v1507 = vpop.xlane.xlu0 %1506
  %v1508 = vsel %vm1501, %v1433, -inf
  %1509 = vmax.xlane.f32.xlu0 %v1508
  %v1510 = vpop.xlane.xlu0 %1509
  %v1511 = vsel %vm1501, %v1438, -inf
  %1512 = vmax.xlane.f32.xlu0 %v1511
  %v1513 = vpop.xlane.xlu0 %1512
  %v1514 = vsel %vm1501, %v1443, -inf
  %1515 = vmax.xlane.f32.xlu0 %v1514
  %v1516 = vpop.xlane.xlu0 %1515
  %v1517 = vsel %vm1501, %v1448, -inf
  %1518 = vmax.xlane.f32.xlu0 %v1517
  %v1519 = vpop.xlane.xlu0 %1518
  %v1520 = vsel %vm1501, %v1453, -inf
  %1521 = vmax.xlane.f32.xlu0 %v1520
  %v1522 = vpop.xlane.xlu0 %1521
  %v1523 = vsel %vm1501, %v1458, -inf
  %1524 = vmax.xlane.f32.xlu0 %v1523
  %v1525 = vpop.xlane.xlu0 %1524
  %v1526 = vsel %vm1501, %v1463, -inf
  %1527 = vmax.xlane.f32.xlu0 %v1526
  %v1528 = vpop.xlane.xlu0 %1527
  %v1529 = vsel %vm1501, %v1468, -inf
  %1530 = vmax.xlane.f32.xlu0 %v1529
  %v1531 = vpop.xlane.xlu0 %1530
  %v1532 = vsel %vm1501, %v1473, -inf
  %1533 = vmax.xlane.f32.xlu0 %v1532
  %v1534 = vpop.xlane.xlu0 %1533
  %v1535 = vsel %vm1501, %v1478, -inf
  %1536 = vmax.xlane.f32.xlu0 %v1535
  %v1537 = vpop.xlane.xlu0 %1536
  %v1538 = vsel %vm1501, %v1483, -inf
  %1539 = vmax.xlane.f32.xlu0 %v1538
  %v1540 = vpop.xlane.xlu0 %1539
  %v1541 = vsel %vm1501, %v1488, -inf
  %1542 = vmax.xlane.f32.xlu0 %v1541
  %v1543 = vpop.xlane.xlu0 %1542
  %v1544 = vsel %vm1501, %v1493, -inf
  %1545 = vmax.xlane.f32.xlu0 %v1544
  %v1546 = vpop.xlane.xlu0 %1545
  %v1547 = vsel %vm1501, %v1498, -inf
  %1548 = vmax.xlane.f32.xlu0 %v1547
  %v1549 = vpop.xlane.xlu0 %1548
  %v1550 = vsub.f32 %v1423, %v1504
  %v1551 = vsub.f32 %v1428, %v1507
  %v1552 = vsub.f32 %v1433, %v1510
  %v1553 = vsub.f32 %v1438, %v1513
  %v1554 = vsub.f32 %v1443, %v1516
  %v1555 = vsub.f32 %v1448, %v1519
  %v1556 = vsub.f32 %v1453, %v1522
  %v1557 = vsub.f32 %v1458, %v1525
  %v1558 = vsub.f32 %v1463, %v1528
  %v1559 = vsub.f32 %v1468, %v1531
  %v1560 = vsub.f32 %v1473, %v1534
  %v1561 = vsub.f32 %v1478, %v1537
  %v1562 = vsub.f32 %v1483, %v1540
  %v1563 = vsub.f32 %v1488, %v1543
  %v1564 = vsub.f32 %v1493, %v1546
  %v1565 = vsub.f32 %v1498, %v1549
  %v1566 = vmul.f32 %v1550, 1.442695
  %v1567 = vpow.pop %v1566
  %v1568 = vmul.f32 %v1551, 1.442695
  %v1569 = vpow.pop %v1568
  %v1570 = vmul.f32 %v1552, 1.442695
  %v1571 = vpow.pop %v1570
  %v1572 = vmul.f32 %v1553, 1.442695
  %v1573 = vpow.pop %v1572
  %v1574 = vmul.f32 %v1554, 1.442695
  %v1575 = vpow.pop %v1574
  %v1576 = vmul.f32 %v1555, 1.442695
  %v1577 = vpow.pop %v1576
  %v1578 = vmul.f32 %v1556, 1.442695
  %v1579 = vpow.pop %v1578
  %v1580 = vmul.f32 %v1557, 1.442695
  %v1581 = vpow.pop %v1580
  %v1582 = vmul.f32 %v1558, 1.442695
  %v1583 = vpow.pop %v1582
  %v1584 = vmul.f32 %v1559, 1.442695
  %v1585 = vpow.pop %v1584
  %v1586 = vmul.f32 %v1560, 1.442695
  %v1587 = vpow.pop %v1586
  %v1588 = vmul.f32 %v1561, 1.442695
  %v1589 = vpow.pop %v1588
  %v1590 = vmul.f32 %v1562, 1.442695
  %v1591 = vpow.pop %v1590
  %v1592 = vmul.f32 %v1563, 1.442695
  %v1593 = vpow.pop %v1592
  %v1594 = vmul.f32 %v1564, 1.442695
  %v1595 = vpow.pop %v1594
  %v1596 = vmul.f32 %v1565, 1.442695
  %v1597 = vpow.pop %v1596
  %v1598 = vsel %vm1501, %v1567, 0.0
  %1599 = vadd.xlane.f32.xlu0 %v1598
  %v1600 = vpop.xlane.xlu0 %1599
  %v1601 = vsel %vm1501, %v1569, 0.0
  %1602 = vadd.xlane.f32.xlu0 %v1601
  %v1603 = vpop.xlane.xlu0 %1602
  %v1604 = vsel %vm1501, %v1571, 0.0
  %1605 = vadd.xlane.f32.xlu0 %v1604
  %v1606 = vpop.xlane.xlu0 %1605
  %v1607 = vsel %vm1501, %v1573, 0.0
  %1608 = vadd.xlane.f32.xlu0 %v1607
  %v1609 = vpop.xlane.xlu0 %1608
  %v1610 = vsel %vm1501, %v1575, 0.0
  %1611 = vadd.xlane.f32.xlu0 %v1610
  %v1612 = vpop.xlane.xlu0 %1611
  %v1613 = vsel %vm1501, %v1577, 0.0
  %1614 = vadd.xlane.f32.xlu0 %v1613
  %v1615 = vpop.xlane.xlu0 %1614
  %v1616 = vsel %vm1501, %v1579, 0.0
  %1617 = vadd.xlane.f32.xlu0 %v1616
  %v1618 = vpop.xlane.xlu0 %1617
  %v1619 = vsel %vm1501, %v1581, 0.0
  %1620 = vadd.xlane.f32.xlu0 %v1619
  %v1621 = vpop.xlane.xlu0 %1620
  %v1622 = vsel %vm1501, %v1583, 0.0
  %1623 = vadd.xlane.f32.xlu0 %v1622
  %v1624 = vpop.xlane.xlu0 %1623
  %v1625 = vsel %vm1501, %v1585, 0.0
  %1626 = vadd.xlane.f32.xlu0 %v1625
  %v1627 = vpop.xlane.xlu0 %1626
  %v1628 = vsel %vm1501, %v1587, 0.0
  %1629 = vadd.xlane.f32.xlu0 %v1628
  %v1630 = vpop.xlane.xlu0 %1629
  %v1631 = vsel %vm1501, %v1589, 0.0
  %1632 = vadd.xlane.f32.xlu0 %v1631
  %v1633 = vpop.xlane.xlu0 %1632
  %v1634 = vsel %vm1501, %v1591, 0.0
  %1635 = vadd.xlane.f32.xlu0 %v1634
  %v1636 = vpop.xlane.xlu0 %1635
  %v1637 = vsel %vm1501, %v1593, 0.0
  %1638 = vadd.xlane.f32.xlu0 %v1637
  %v1639 = vpop.xlane.xlu0 %1638
  %v1640 = vsel %vm1501, %v1595, 0.0
  %1641 = vadd.xlane.f32.xlu0 %v1640
  %v1642 = vpop.xlane.xlu0 %1641
  %v1643 = vsel %vm1501, %v1597, 0.0
  %1644 = vadd.xlane.f32.xlu0 %v1643
  %v1645 = vpop.xlane.xlu0 %1644
  %v1646 = vrcp.pop %v1600
  %v1647 = vrcp.pop %v1603
  %v1648 = vrcp.pop %v1606
  %v1649 = vrcp.pop %v1609
  %v1650 = vrcp.pop %v1612
  %v1651 = vrcp.pop %v1615
  %v1652 = vrcp.pop %v1618
  %v1653 = vrcp.pop %v1621
  %v1654 = vrcp.pop %v1624
  %v1655 = vrcp.pop %v1627
  %v1656 = vrcp.pop %v1630
  %v1657 = vrcp.pop %v1633
  %v1658 = vrcp.pop %v1636
  %v1659 = vrcp.pop %v1639
  %v1660 = vrcp.pop %v1642
  %v1661 = vrcp.pop %v1645
  %v1662 = vmul.f32 %v1567, %v1646
  %v1663 = vmul.f32 %v1569, %v1647
  %v1664 = vmul.f32 %v1571, %v1648
  %v1665 = vmul.f32 %v1573, %v1649
  %v1666 = vmul.f32 %v1575, %v1650
  %v1667 = vmul.f32 %v1577, %v1651
  %v1668 = vmul.f32 %v1579, %v1652
  %v1669 = vmul.f32 %v1581, %v1653
  %v1670 = vmul.f32 %v1583, %v1654
  %v1671 = vmul.f32 %v1585, %v1655
  %v1672 = vmul.f32 %v1587, %v1656
  %v1673 = vmul.f32 %v1589, %v1657
  %v1674 = vmul.f32 %v1591, %v1658
  %v1675 = vmul.f32 %v1593, %v1659
  %v1676 = vmul.f32 %v1595, %v1660
  %v1677 = vmul.f32 %v1597, %v1661
  %1678 = vst.msk [vmem:[%s7] sm:$0xff] %vm1501, %v1662
  %1679 = vst.msk [vmem:[%s7 + $0x8] sm:$0xff] %vm1501, %v1663
  %1680 = vst.msk [vmem:[%s7 + $0x10] sm:$0xff] %vm1501, %v1664
  %1681 = vst.msk [vmem:[%s7 + $0x18] sm:$0xff] %vm1501, %v1665
  %1682 = vst.msk [vmem:[%s7 + $0x20] sm:$0xff] %vm1501, %v1666
  %1683 = vst.msk [vmem:[%s7 + $0x28] sm:$0xff] %vm1501, %v1667
  %1684 = vst.msk [vmem:[%s7 + $0x30] sm:$0xff] %vm1501, %v1668
  %1685 = vst.msk [vmem:[%s7 + $0x38] sm:$0xff] %vm1501, %v1669
  %1686 = vst.msk [vmem:[%s7 + $0x40] sm:$0xff] %vm1501, %v1670
  %1687 = vst.msk [vmem:[%s7 + $0x48] sm:$0xff] %vm1501, %v1671
  %1688 = vst.msk [vmem:[%s7 + $0x50] sm:$0xff] %vm1501, %v1672
  %1689 = vst.msk [vmem:[%s7 + $0x58] sm:$0xff] %vm1501, %v1673
  %1690 = vst.msk [vmem:[%s7 + $0x60] sm:$0xff] %vm1501, %v1674
  %1691 = vst.msk [vmem:[%s7 + $0x68] sm:$0xff] %vm1501, %v1675
  %1692 = vst.msk [vmem:[%s7 + $0x70] sm:$0xff] %vm1501, %v1676
  %1693 = vst.msk [vmem:[%s7 + $0x78] sm:$0xff] %vm1501, %v1677
  // Predicated region
  $region30: #{generator_forward.1} parent=0 // pred_check
    _
  $region31: #{generator_forward.1} parent=0 // pred_check_branch
    %1695 = sbr.rel (0) target = $region33
  $region32: #{generator_forward.1} parent=0 // pred_region
    _
  $region33: #{generator_forward.1} parent=0 // pred_fallthru
    _
  // Predicated region
  $region34: #{generator_forward.1} parent=0 // pred_check
    _
  $region35: #{generator_forward.1} parent=0 // pred_check_branch
    %1697 = sbr.rel (0) target = $region37
  $region36: #{generator_forward.1} parent=0 // pred_region
    _
  $region37: #{generator_forward.1} parent=0 // pred_fallthru
    _

</llo_original>
